<compile_context>
chip_gen: v7x
topology: tpu7x:2x2x1
jax: 0.10.0
libtpu: 0.0.40
codegen_flags: <defaults>
</compile_context>

<pallas_src>
import functools

import jax
import jax.numpy as jnp
from jax.experimental import pallas as pl
from jax.experimental.pallas import tpu as pltpu


MAX_LOGSTD = 10.0
BN_EPS = 0.001

_COMPILER_PARAMS = pltpu.CompilerParams(dimension_semantics=("arbitrary",))


def _spec(shape):
    rank = len(shape)
    return pl.BlockSpec(shape, lambda i, _r=rank: (0,) * _r)


# ----------------------------------------------------------------------------
# The single fused forward kernel.
# ----------------------------------------------------------------------------
def _fused_forward_kernel(
        x_ref, a_ref, cntp_ref, wsum_ref, cntn_ref,
        enc1_w_ref, enc1_b_ref, enc2_w_ref, enc2_b_ref,
        gcf_w_ref, gcf_b_ref, gcml_w_ref, gcml_b_ref,
        head_wx_ref, head_wg_ref, head_b_ref,
        dec_w_ref, dec_b_ref,
        cls_ref, dae_ref, gae_ref, *,
        gae_out, feat_dim, inv_nd, inv_e_pos, inv_e_neg, inv_n2):

    def mm(a, b):
        return jnp.dot(a, b, preferred_element_type=jnp.float32)

    def elu(y):                                  # nn.ELU(alpha=1)
        return jnp.where(y > 0.0, y, jnp.exp(jnp.minimum(y, 0.0)) - 1.0)

    def softplus(s):
        return jnp.maximum(s, 0.0) + jnp.log1p(jnp.exp(-jnp.abs(s)))

    def total(m):                                # full reduction -> (1,1)
        return jnp.sum(jnp.sum(m, axis=1, keepdims=True), axis=0, keepdims=True)

    x = x_ref[...]
    a_hat = a_ref[...]

    # --- encoder: two full_blocks (Linear + BN folded + ELU + Dropout=id) ----
    h1 = elu(mm(x, enc1_w_ref[...]) + enc1_b_ref[...])
    feat_x = elu(mm(h1, enc2_w_ref[...]) + enc2_b_ref[...])

    # --- VGAE GraphEncoder: GCN -> relu -> fused [mu | logstd] GCN heads -----
    # GCN is A_hat @ (X @ W) + b, both matmuls fused in-kernel (H stays in VMEM)
    hg = jnp.maximum(mm(a_hat, mm(feat_x, gcf_w_ref[...])) + gcf_b_ref[...], 0.0)
    ml = mm(a_hat, mm(hg, gcml_w_ref[...])) + gcml_b_ref[...]
    mu = ml[:, :gae_out]
    logstd = jnp.minimum(ml[:, gae_out:], MAX_LOGSTD)
    # eval-mode reparametrize: feat_g = mu

    # --- concat(feat_x, mu) @ [fcx | fcg | cls], split-K so no concat needed -
    heads = (mm(feat_x, head_wx_ref[...]) + mm(mu, head_wg_ref[...])
             + head_b_ref[...])
    feat_x2 = elu(heads[:, :feat_dim])
    feat_g2 = elu(heads[:, feat_dim:2 * feat_dim])
    cls_ref[...] = heads[:, 2 * feat_dim:]

    # --- DAE reconstruction (MSE of decoder(feat_x2) vs x) -------------------
    diff = mm(feat_x2, dec_w_ref[...]) + dec_b_ref[...] - x
    dae_ref[...] = total(diff * diff) * inv_nd

    # --- GAE recon loss via all-pairs score matrix S = Z Z^T -----------------
    # per-edge BCE sum == sum_ij [ Wsum_ij*softplus(-S_ij)
    #                              + (Cnt_ij - Wsum_ij)*softplus(S_ij) ]
    s = jax.lax.dot_general(feat_g2, feat_g2, (((1,), (1,)), ((), ())),
                            preferred_element_type=jnp.float32)
    sp_pos = softplus(s)                         # softplus(s)
    sp_neg = sp_pos - s                          # softplus(-s)
    cntp = cntp_ref[...]
    wsum = wsum_ref[...]
    pos_mat = wsum * sp_neg + (cntp - wsum) * sp_pos
    neg_mat = cntn_ref[...] * sp_pos             # -logsigmoid(-s) = softplus(s)

    # --- KL term of VGAE ------------------------------------------------------
    kl_mat = 1.0 + 2.0 * logstd - mu * mu - jnp.exp(2.0 * logstd)

    gae_ref[...] = (total(pos_mat) * inv_e_pos
                    + total(neg_mat) * inv_e_neg
                    - 0.5 * total(kl_mat) * inv_n2)


# ----------------------------------------------------------------------------
# One-time parameter transform: fold BN, concatenate heads, reshape biases.
# ----------------------------------------------------------------------------
def fold_params(p):
    f32 = jnp.float32
    f = {}
    f["enc1_w"] = (p["enc1_w"] * p["enc1_scale"][None, :]).astype(f32)
    f["enc1_b"] = (p["enc1_b"] * p["enc1_scale"] + p["enc1_shift"]).reshape(1, -1)
    f["enc2_w"] = (p["enc2_w"] * p["enc2_scale"][None, :]).astype(f32)
    f["enc2_b"] = (p["enc2_b"] * p["enc2_scale"] + p["enc2_shift"]).reshape(1, -1)

    f["gcf_w"] = p["gcf_w"].astype(f32)
    f["gcf_b"] = p["gcf_b"].reshape(1, -1).astype(f32)
    f["gcml_w"] = jnp.concatenate([p["gcm_w"], p["gcl_w"]], axis=1).astype(f32)
    f["gcml_b"] = jnp.concatenate([p["gcm_b"], p["gcl_b"]]).reshape(1, -1).astype(f32)

    head_w = jnp.concatenate([p["fcx_w"], p["fcg_w"], p["cls_w"]], axis=1).astype(f32)
    dae1 = p["enc2_w"].shape[1]                  # = dae_dim[1]
    f["head_wx"] = head_w[:dae1]                 # rows consuming feat_x
    f["head_wg"] = head_w[dae1:]                 # rows consuming feat_g (= mu)
    f["head_b"] = jnp.concatenate(
        [p["fcx_b"], p["fcg_b"], p["cls_b"]]).reshape(1, -1).astype(f32)
    f["num_classes"] = int(p["cls_b"].shape[0])

    f["dec_w"] = p["dec_w"].astype(f32)
    f["dec_b"] = p["dec_b"].reshape(1, -1).astype(f32)
    return f


# ----------------------------------------------------------------------------
# Graph-structure precompute (hoistable: fixed for a fixed graph).
# ----------------------------------------------------------------------------
def _normalized_adjacency(edge_index, edge_weight, n):
    # GCNConv gcn_norm with self loops: D^-1/2 (A + I) D^-1/2, A[dst, src] = w
    src, dst = edge_index[0], edge_index[1]
    a = jnp.zeros((n, n), jnp.float32).at[dst, src].add(edge_weight.astype(jnp.float32))
    a = a + jnp.eye(n, dtype=jnp.float32)
    deg = jnp.sum(a, axis=1)
    dinv = 1.0 / jnp.sqrt(jnp.maximum(deg, 1e-12))
    return a * dinv[:, None] * dinv[None, :]


def prepare_graph(edge_index, edge_weight, neg_edge_index, n):
    f32 = jnp.float32
    a_hat = _normalized_adjacency(edge_index, edge_weight, n)
    src, dst = edge_index[0], edge_index[1]
    cnt_pos = jnp.zeros((n, n), f32).at[src, dst].add(1.0)
    wsum_pos = jnp.zeros((n, n), f32).at[src, dst].add(edge_weight.astype(f32))
    nsrc, ndst = neg_edge_index[0], neg_edge_index[1]
    cnt_neg = jnp.zeros((n, n), f32).at[nsrc, ndst].add(1.0)
    return (a_hat, cnt_pos, wsum_pos, cnt_neg,
            int(edge_index.shape[1]), int(neg_edge_index.shape[1]))


# ----------------------------------------------------------------------------
# Parameter init (raw, module-structured; BN stats generated then folded).
# ----------------------------------------------------------------------------
def init_params(key, input_dim, num_classes, gae_dim, dae_dim, feat_dim):
    fcat_dim = dae_dim[1] + gae_dim[1]
    assert fcat_dim == dae_dim[1] + gae_dim[1]
    ks = iter(jax.random.split(key, 32))

    def lin(in_f, out_f):
        return (0.1 * jax.random.normal(next(ks), (in_f, out_f), jnp.float32),
                0.05 * jax.random.normal(next(ks), (out_f,), jnp.float32))

    def bn(f):
        gamma = 1.0 + 0.1 * jax.random.normal(next(ks), (f,), jnp.float32)
        beta = 0.1 * jax.random.normal(next(ks), (f,), jnp.float32)
        rm = 0.05 * jax.random.normal(next(ks), (f,), jnp.float32)
        rv = 1.0 + 0.1 * jnp.abs(jax.random.normal(next(ks), (f,), jnp.float32))
        scale = gamma / jnp.sqrt(rv + BN_EPS)
        shift = beta - rm * scale
        return scale, shift

    p = {}
    p["enc1_w"], p["enc1_b"] = lin(input_dim, dae_dim[0])
    p["enc1_scale"], p["enc1_shift"] = bn(dae_dim[0])
    p["enc2_w"], p["enc2_b"] = lin(dae_dim[0], dae_dim[1])
    p["enc2_scale"], p["enc2_shift"] = bn(dae_dim[1])
    p["dec_w"], p["dec_b"] = lin(feat_dim, input_dim)
    p["gcf_w"], p["gcf_b"] = lin(dae_dim[1], gae_dim[0])
    p["gcm_w"], p["gcm_b"] = lin(gae_dim[0], gae_dim[1])
    p["gcl_w"], p["gcl_b"] = lin(gae_dim[0], gae_dim[1])
    p["fcx_w"], p["fcx_b"] = lin(fcat_dim, feat_dim)
    p["fcg_w"], p["fcg_b"] = lin(fcat_dim, feat_dim)
    p["cls_w"], p["cls_b"] = lin(fcat_dim, num_classes)
    return p


# ----------------------------------------------------------------------------
# Forward: one pallas_call.
# ----------------------------------------------------------------------------
def spatial_model_forward(fp, x, graph):
    a_hat, cnt_pos, wsum_pos, cnt_neg, e_pos, e_neg = graph
    n, input_dim = x.shape
    feat_dim = int(fp["dec_w"].shape[0])
    gae_out = int(fp["gcml_w"].shape[1]) // 2
    num_classes = int(fp["num_classes"])

    operands = [x.astype(jnp.float32), a_hat, cnt_pos, wsum_pos, cnt_neg,
                fp["enc1_w"], fp["enc1_b"], fp["enc2_w"], fp["enc2_b"],
                fp["gcf_w"], fp["gcf_b"], fp["gcml_w"], fp["gcml_b"],
                fp["head_wx"], fp["head_wg"], fp["head_b"],
                fp["dec_w"], fp["dec_b"]]

    kernel = functools.partial(
        _fused_forward_kernel,
        gae_out=gae_out, feat_dim=feat_dim,
        inv_nd=1.0 / float(n * input_dim),
        inv_e_pos=1.0 / float(e_pos),
        inv_e_neg=1.0 / float(e_neg),
        inv_n2=1.0 / float(n * n))

    cls, dae, gae = pl.pallas_call(
        kernel,
        out_shape=(jax.ShapeDtypeStruct((n, num_classes), jnp.float32),
                   jax.ShapeDtypeStruct((1, 1), jnp.float32),
                   jax.ShapeDtypeStruct((1, 1), jnp.float32)),
        grid=(1,),
        in_specs=[_spec(o.shape) for o in operands],
        out_specs=(_spec((n, num_classes)), _spec((1, 1)), _spec((1, 1))),
        compiler_params=_COMPILER_PARAMS,
    )(*operands)

    return cls, dae[0, 0], gae[0, 0]


# ----------------------------------------------------------------------------
if __name__ == "__main__":
    # small shapes consistent with the module
    N = 16                 # nodes ("batch")
    INPUT_DIM = 32
    NUM_CLASSES = 4
    DAE_DIM = [32, 16]
    GAE_DIM = [16, 8]
    FEAT_DIM = 16
    E = 40                 # positive edges (no self loops by construction)

    key = jax.random.PRNGKey(0)
    k_x, k_src, k_off, k_w, k_neg, k_par = jax.random.split(key, 6)

    x = jax.random.normal(k_x, (N, INPUT_DIM), jnp.float32)

    src = jax.random.randint(k_src, (E,), 0, N)
    off = jax.random.randint(k_off, (E,), 1, N)          # avoid self loops
    dst = (src + off) % N
    edge_index = jnp.stack([src, dst], axis=0)
    edge_weight = jax.random.uniform(k_w, (E,), jnp.float32, 0.1, 1.0)

    # negative_sampling(pos_edge_index after remove+add self loops, N):
    # number of negatives = E (no self loops in pos) + N added self loops
    E_NEG = E + N
    k_ns, k_nd = jax.random.split(k_neg)
    neg_src = jax.random.randint(k_ns, (E_NEG,), 0, N)
    neg_dst = jax.random.randint(k_nd, (E_NEG,), 0, N)
    neg_edge_index = jnp.stack([neg_src, neg_dst], axis=0)

    raw = init_params(k_par, INPUT_DIM, NUM_CLASSES, GAE_DIM, DAE_DIM, FEAT_DIM)
    params = fold_params(raw)                    # one-time fold (BN, head concat)
    graph = prepare_graph(edge_index, edge_weight, neg_edge_index, N)  # hoistable

    cls, dae_loss, gae_loss = spatial_model_forward(params, x, graph)

    jax.block_until_ready((cls, dae_loss, gae_loss))
    assert cls.shape == (N, NUM_CLASSES)
    assert jnp.isfinite(dae_loss) and jnp.isfinite(gae_loss)
    print("KERNEL_OK")
</pallas_src>

<mosaic_0001>
module attributes {stable_mosaic.version = 11 : i64} {
  func.func @_fused_forward_kernel(%arg0: i32, %arg1: memref<16x32xf32, #tpu.memory_space<vmem>>, %arg2: memref<16x16xf32, #tpu.memory_space<vmem>>, %arg3: memref<16x16xf32, #tpu.memory_space<vmem>>, %arg4: memref<16x16xf32, #tpu.memory_space<vmem>>, %arg5: memref<16x16xf32, #tpu.memory_space<vmem>>, %arg6: memref<32x32xf32, #tpu.memory_space<vmem>>, %arg7: memref<1x32xf32, #tpu.memory_space<vmem>>, %arg8: memref<32x16xf32, #tpu.memory_space<vmem>>, %arg9: memref<1x16xf32, #tpu.memory_space<vmem>>, %arg10: memref<16x16xf32, #tpu.memory_space<vmem>>, %arg11: memref<1x16xf32, #tpu.memory_space<vmem>>, %arg12: memref<16x16xf32, #tpu.memory_space<vmem>>, %arg13: memref<1x16xf32, #tpu.memory_space<vmem>>, %arg14: memref<16x36xf32, #tpu.memory_space<vmem>>, %arg15: memref<8x36xf32, #tpu.memory_space<vmem>>, %arg16: memref<1x36xf32, #tpu.memory_space<vmem>>, %arg17: memref<16x32xf32, #tpu.memory_space<vmem>>, %arg18: memref<1x32xf32, #tpu.memory_space<vmem>>, %arg19: memref<16x4xf32, #tpu.memory_space<vmem>>, %arg20: memref<1x1xf32, #tpu.memory_space<vmem>>, %arg21: memref<1x1xf32, #tpu.memory_space<vmem>>) attributes {dimension_semantics = [#tpu.dimension_semantics<arbitrary>], iteration_bounds = array<i64: 1>, scalar_prefetch = 0 : i64, scratch_operands = 0 : i64, tpu.core_type = #tpu.core_type<tc>, window_params = [{pipeline_mode = #tpu.pipeline_mode<synchronous>, transform_indices = @transform_0, window_bounds = array<i64: 16, 32>}, {pipeline_mode = #tpu.pipeline_mode<synchronous>, transform_indices = @transform_1, window_bounds = array<i64: 16, 16>}, {pipeline_mode = #tpu.pipeline_mode<synchronous>, transform_indices = @transform_2, window_bounds = array<i64: 16, 16>}, {pipeline_mode = #tpu.pipeline_mode<synchronous>, transform_indices = @transform_3, window_bounds = array<i64: 16, 16>}, {pipeline_mode = #tpu.pipeline_mode<synchronous>, transform_indices = @transform_4, window_bounds = array<i64: 16, 16>}, {pipeline_mode = #tpu.pipeline_mode<synchronous>, transform_indices = @transform_5, window_bounds = array<i64: 32, 32>}, {pipeline_mode = #tpu.pipeline_mode<synchronous>, transform_indices = @transform_6, window_bounds = array<i64: 1, 32>}, {pipeline_mode = #tpu.pipeline_mode<synchronous>, transform_indices = @transform_7, window_bounds = array<i64: 32, 16>}, {pipeline_mode = #tpu.pipeline_mode<synchronous>, transform_indices = @transform_8, window_bounds = array<i64: 1, 16>}, {pipeline_mode = #tpu.pipeline_mode<synchronous>, transform_indices = @transform_9, window_bounds = array<i64: 16, 16>}, {pipeline_mode = #tpu.pipeline_mode<synchronous>, transform_indices = @transform_10, window_bounds = array<i64: 1, 16>}, {pipeline_mode = #tpu.pipeline_mode<synchronous>, transform_indices = @transform_11, window_bounds = array<i64: 16, 16>}, {pipeline_mode = #tpu.pipeline_mode<synchronous>, transform_indices = @transform_12, window_bounds = array<i64: 1, 16>}, {pipeline_mode = #tpu.pipeline_mode<synchronous>, transform_indices = @transform_13, window_bounds = array<i64: 16, 36>}, {pipeline_mode = #tpu.pipeline_mode<synchronous>, transform_indices = @transform_14, window_bounds = array<i64: 8, 36>}, {pipeline_mode = #tpu.pipeline_mode<synchronous>, transform_indices = @transform_15, window_bounds = array<i64: 1, 36>}, {pipeline_mode = #tpu.pipeline_mode<synchronous>, transform_indices = @transform_16, window_bounds = array<i64: 16, 32>}, {pipeline_mode = #tpu.pipeline_mode<synchronous>, transform_indices = @transform_17, window_bounds = array<i64: 1, 32>}, {pipeline_mode = #tpu.pipeline_mode<synchronous>, transform_indices = @transform_18, window_bounds = array<i64: 16, 4>}, {pipeline_mode = #tpu.pipeline_mode<synchronous>, transform_indices = @transform_19, window_bounds = array<i64: 1, 1>}, {pipeline_mode = #tpu.pipeline_mode<synchronous>, transform_indices = @transform_20, window_bounds = array<i64: 1, 1>}]} {
    %c0 = arith.constant 0 : index
    %c0_0 = arith.constant 0 : index
    %0 = vector.load %arg1[%c0, %c0_0] : memref<16x32xf32, #tpu.memory_space<vmem>>, vector<16x32xf32>
    %c0_1 = arith.constant 0 : index
    %c0_2 = arith.constant 0 : index
    %1 = vector.load %arg2[%c0_1, %c0_2] : memref<16x16xf32, #tpu.memory_space<vmem>>, vector<16x16xf32>
    %c0_3 = arith.constant 0 : index
    %c0_4 = arith.constant 0 : index
    %2 = vector.load %arg6[%c0_3, %c0_4] : memref<32x32xf32, #tpu.memory_space<vmem>>, vector<32x32xf32>
    %cst = arith.constant dense<0.000000e+00> : vector<16x32xf32>
    %3 = tpu.matmul %0, %2, %cst {dimension_numbers = #tpu.dot_dimension_numbers<[1], [0], [0], [1], [0, 0, 1, 1], [], []>} : vector<16x32xf32>, vector<32x32xf32>, vector<16x32xf32> -> vector<16x32xf32>
    %c0_5 = arith.constant 0 : index
    %c0_6 = arith.constant 0 : index
    %4 = vector.load %arg7[%c0_5, %c0_6] : memref<1x32xf32, #tpu.memory_space<vmem>>, vector<1x32xf32>
    %5 = vector.broadcast %4 : vector<1x32xf32> to vector<16x32xf32>
    %6 = arith.addf %3, %5 : vector<16x32xf32>
    %cst_7 = arith.constant 0.000000e+00 : f32
    %7 = vector.broadcast %cst_7 : f32 to vector<16x32xf32>
    %8 = arith.cmpf ogt, %6, %7 : vector<16x32xf32>
    %cst_8 = arith.constant 0.000000e+00 : f32
    %9 = vector.broadcast %cst_8 : f32 to vector<16x32xf32>
    %10 = arith.minimumf %6, %9 : vector<16x32xf32>
    %11 = math.exp %10 : vector<16x32xf32>
    %cst_9 = arith.constant 1.000000e+00 : f32
    %12 = vector.broadcast %cst_9 : f32 to vector<16x32xf32>
    %13 = arith.subf %11, %12 : vector<16x32xf32>
    %14 = arith.select %8, %6, %13 : vector<16x32xi1>, vector<16x32xf32>
    %c0_10 = arith.constant 0 : index
    %c0_11 = arith.constant 0 : index
    %15 = vector.load %arg8[%c0_10, %c0_11] : memref<32x16xf32, #tpu.memory_space<vmem>>, vector<32x16xf32>
    %cst_12 = arith.constant dense<0.000000e+00> : vector<16x16xf32>
    %16 = tpu.matmul %14, %15, %cst_12 {dimension_numbers = #tpu.dot_dimension_numbers<[1], [0], [0], [1], [0, 0, 1, 1], [], []>} : vector<16x32xf32>, vector<32x16xf32>, vector<16x16xf32> -> vector<16x16xf32>
    %c0_13 = arith.constant 0 : index
    %c0_14 = arith.constant 0 : index
    %17 = vector.load %arg9[%c0_13, %c0_14] : memref<1x16xf32, #tpu.memory_space<vmem>>, vector<1x16xf32>
    %18 = vector.broadcast %17 : vector<1x16xf32> to vector<16x16xf32>
    %19 = arith.addf %16, %18 : vector<16x16xf32>
    %cst_15 = arith.constant 0.000000e+00 : f32
    %20 = vector.broadcast %cst_15 : f32 to vector<16x16xf32>
    %21 = arith.cmpf ogt, %19, %20 : vector<16x16xf32>
    %cst_16 = arith.constant 0.000000e+00 : f32
    %22 = vector.broadcast %cst_16 : f32 to vector<16x16xf32>
    %23 = arith.minimumf %19, %22 : vector<16x16xf32>
    %24 = math.exp %23 : vector<16x16xf32>
    %cst_17 = arith.constant 1.000000e+00 : f32
    %25 = vector.broadcast %cst_17 : f32 to vector<16x16xf32>
    %26 = arith.subf %24, %25 : vector<16x16xf32>
    %27 = arith.select %21, %19, %26 : vector<16x16xi1>, vector<16x16xf32>
    %c0_18 = arith.constant 0 : index
    %c0_19 = arith.constant 0 : index
    %28 = vector.load %arg10[%c0_18, %c0_19] : memref<16x16xf32, #tpu.memory_space<vmem>>, vector<16x16xf32>
    %cst_20 = arith.constant dense<0.000000e+00> : vector<16x16xf32>
    %29 = tpu.matmul %27, %28, %cst_20 {dimension_numbers = #tpu.dot_dimension_numbers<[1], [0], [0], [1], [0, 0, 1, 1], [], []>} : vector<16x16xf32>, vector<16x16xf32>, vector<16x16xf32> -> vector<16x16xf32>
    %cst_21 = arith.constant dense<0.000000e+00> : vector<16x16xf32>
    %30 = tpu.matmul %1, %29, %cst_21 {dimension_numbers = #tpu.dot_dimension_numbers<[1], [0], [0], [1], [0, 0, 1, 1], [], []>} : vector<16x16xf32>, vector<16x16xf32>, vector<16x16xf32> -> vector<16x16xf32>
    %c0_22 = arith.constant 0 : index
    %c0_23 = arith.constant 0 : index
    %31 = vector.load %arg11[%c0_22, %c0_23] : memref<1x16xf32, #tpu.memory_space<vmem>>, vector<1x16xf32>
    %32 = vector.broadcast %31 : vector<1x16xf32> to vector<16x16xf32>
    %33 = arith.addf %30, %32 : vector<16x16xf32>
    %cst_24 = arith.constant 0.000000e+00 : f32
    %34 = vector.broadcast %cst_24 : f32 to vector<16x16xf32>
    %35 = arith.maximumf %33, %34 : vector<16x16xf32>
    %c0_25 = arith.constant 0 : index
    %c0_26 = arith.constant 0 : index
    %36 = vector.load %arg12[%c0_25, %c0_26] : memref<16x16xf32, #tpu.memory_space<vmem>>, vector<16x16xf32>
    %cst_27 = arith.constant dense<0.000000e+00> : vector<16x16xf32>
    %37 = tpu.matmul %35, %36, %cst_27 {dimension_numbers = #tpu.dot_dimension_numbers<[1], [0], [0], [1], [0, 0, 1, 1], [], []>} : vector<16x16xf32>, vector<16x16xf32>, vector<16x16xf32> -> vector<16x16xf32>
    %cst_28 = arith.constant dense<0.000000e+00> : vector<16x16xf32>
    %38 = tpu.matmul %1, %37, %cst_28 {dimension_numbers = #tpu.dot_dimension_numbers<[1], [0], [0], [1], [0, 0, 1, 1], [], []>} : vector<16x16xf32>, vector<16x16xf32>, vector<16x16xf32> -> vector<16x16xf32>
    %c0_29 = arith.constant 0 : index
    %c0_30 = arith.constant 0 : index
    %39 = vector.load %arg13[%c0_29, %c0_30] : memref<1x16xf32, #tpu.memory_space<vmem>>, vector<1x16xf32>
    %40 = vector.broadcast %39 : vector<1x16xf32> to vector<16x16xf32>
    %41 = arith.addf %38, %40 : vector<16x16xf32>
    %42 = vector.extract_strided_slice %41 {offsets = [0, 0], sizes = [16, 8], strides = [1, 1]} : vector<16x16xf32> to vector<16x8xf32>
    %43 = vector.extract_strided_slice %41 {offsets = [0, 8], sizes = [16, 8], strides = [1, 1]} : vector<16x16xf32> to vector<16x8xf32>
    %cst_31 = arith.constant 1.000000e+01 : f32
    %44 = vector.broadcast %cst_31 : f32 to vector<16x8xf32>
    %45 = arith.minimumf %43, %44 : vector<16x8xf32>
    %c0_32 = arith.constant 0 : index
    %c0_33 = arith.constant 0 : index
    %46 = vector.load %arg14[%c0_32, %c0_33] : memref<16x36xf32, #tpu.memory_space<vmem>>, vector<16x36xf32>
    %cst_34 = arith.constant dense<0.000000e+00> : vector<16x36xf32>
    %47 = tpu.matmul %27, %46, %cst_34 {dimension_numbers = #tpu.dot_dimension_numbers<[1], [0], [0], [1], [0, 0, 1, 1], [], []>} : vector<16x16xf32>, vector<16x36xf32>, vector<16x36xf32> -> vector<16x36xf32>
    %c0_35 = arith.constant 0 : index
    %c0_36 = arith.constant 0 : index
    %48 = vector.load %arg15[%c0_35, %c0_36] : memref<8x36xf32, #tpu.memory_space<vmem>>, vector<8x36xf32>
    %cst_37 = arith.constant dense<0.000000e+00> : vector<16x36xf32>
    %49 = tpu.matmul %42, %48, %cst_37 {dimension_numbers = #tpu.dot_dimension_numbers<[1], [0], [0], [1], [0, 0, 1, 1], [], []>} : vector<16x8xf32>, vector<8x36xf32>, vector<16x36xf32> -> vector<16x36xf32>
    %50 = arith.addf %47, %49 : vector<16x36xf32>
    %c0_38 = arith.constant 0 : index
    %c0_39 = arith.constant 0 : index
    %51 = vector.load %arg16[%c0_38, %c0_39] : memref<1x36xf32, #tpu.memory_space<vmem>>, vector<1x36xf32>
    %52 = vector.broadcast %51 : vector<1x36xf32> to vector<16x36xf32>
    %53 = arith.addf %50, %52 : vector<16x36xf32>
    %54 = vector.extract_strided_slice %53 {offsets = [0, 0], sizes = [16, 16], strides = [1, 1]} : vector<16x36xf32> to vector<16x16xf32>
    %cst_40 = arith.constant 0.000000e+00 : f32
    %55 = vector.broadcast %cst_40 : f32 to vector<16x16xf32>
    %56 = arith.cmpf ogt, %54, %55 : vector<16x16xf32>
    %cst_41 = arith.constant 0.000000e+00 : f32
    %57 = vector.broadcast %cst_41 : f32 to vector<16x16xf32>
    %58 = arith.minimumf %54, %57 : vector<16x16xf32>
    %59 = math.exp %58 : vector<16x16xf32>
    %cst_42 = arith.constant 1.000000e+00 : f32
    %60 = vector.broadcast %cst_42 : f32 to vector<16x16xf32>
    %61 = arith.subf %59, %60 : vector<16x16xf32>
    %62 = arith.select %56, %54, %61 : vector<16x16xi1>, vector<16x16xf32>
    %63 = vector.extract_strided_slice %53 {offsets = [0, 16], sizes = [16, 16], strides = [1, 1]} : vector<16x36xf32> to vector<16x16xf32>
    %cst_43 = arith.constant 0.000000e+00 : f32
    %64 = vector.broadcast %cst_43 : f32 to vector<16x16xf32>
    %65 = arith.cmpf ogt, %63, %64 : vector<16x16xf32>
    %cst_44 = arith.constant 0.000000e+00 : f32
    %66 = vector.broadcast %cst_44 : f32 to vector<16x16xf32>
    %67 = arith.minimumf %63, %66 : vector<16x16xf32>
    %68 = math.exp %67 : vector<16x16xf32>
    %cst_45 = arith.constant 1.000000e+00 : f32
    %69 = vector.broadcast %cst_45 : f32 to vector<16x16xf32>
    %70 = arith.subf %68, %69 : vector<16x16xf32>
    %71 = arith.select %65, %63, %70 : vector<16x16xi1>, vector<16x16xf32>
    %72 = vector.extract_strided_slice %53 {offsets = [0, 32], sizes = [16, 4], strides = [1, 1]} : vector<16x36xf32> to vector<16x4xf32>
    %c0_46 = arith.constant 0 : index
    %c0_47 = arith.constant 0 : index
    %73 = vector.load %arg19[%c0_46, %c0_47] : memref<16x4xf32, #tpu.memory_space<vmem>>, vector<16x4xf32>
    tpu.vector_store %arg19[%c0_46, %c0_47], %72 {strides = array<i32>} : memref<16x4xf32, #tpu.memory_space<vmem>>, vector<16x4xf32>,
    %c0_48 = arith.constant 0 : index
    %c0_49 = arith.constant 0 : index
    %74 = vector.load %arg17[%c0_48, %c0_49] : memref<16x32xf32, #tpu.memory_space<vmem>>, vector<16x32xf32>
    %cst_50 = arith.constant dense<0.000000e+00> : vector<16x32xf32>
    %75 = tpu.matmul %62, %74, %cst_50 {dimension_numbers = #tpu.dot_dimension_numbers<[1], [0], [0], [1], [0, 0, 1, 1], [], []>} : vector<16x16xf32>, vector<16x32xf32>, vector<16x32xf32> -> vector<16x32xf32>
    %c0_51 = arith.constant 0 : index
    %c0_52 = arith.constant 0 : index
    %76 = vector.load %arg18[%c0_51, %c0_52] : memref<1x32xf32, #tpu.memory_space<vmem>>, vector<1x32xf32>
    %77 = vector.broadcast %76 : vector<1x32xf32> to vector<16x32xf32>
    %78 = arith.addf %75, %77 : vector<16x32xf32>
    %79 = arith.subf %78, %0 : vector<16x32xf32>
    %80 = arith.mulf %79, %79 : vector<16x32xf32>
    %cst_53 = arith.constant dense<0.000000e+00> : vector<16xf32>
    %81 = vector.multi_reduction <add>, %80, %cst_53 [1] : vector<16x32xf32> to vector<16xf32>
    %82 = vector.shape_cast %81 : vector<16xf32> to vector<16x1xf32>
    %cst_54 = arith.constant dense<0.000000e+00> : vector<1xf32>
    %83 = vector.multi_reduction <add>, %82, %cst_54 [0] : vector<16x1xf32> to vector<1xf32>
    %84 = vector.shape_cast %83 : vector<1xf32> to vector<1x1xf32>
    %cst_55 = arith.constant 0.001953125 : f32
    %85 = vector.broadcast %cst_55 : f32 to vector<1x1xf32>
    %86 = arith.mulf %84, %85 : vector<1x1xf32>
    %c0_56 = arith.constant 0 : index
    %c0_57 = arith.constant 0 : index
    %87 = vector.load %arg20[%c0_56, %c0_57] : memref<1x1xf32, #tpu.memory_space<vmem>>, vector<1x1xf32>
    tpu.vector_store %arg20[%c0_56, %c0_57], %86 {strides = array<i32>} : memref<1x1xf32, #tpu.memory_space<vmem>>, vector<1x1xf32>,
    %cst_58 = arith.constant dense<0.000000e+00> : vector<16x16xf32>
    %88 = tpu.matmul %71, %71, %cst_58 {dimension_numbers = #tpu.dot_dimension_numbers<[1], [1], [0], [0], [0, 0, 1, 0], [], []>} : vector<16x16xf32>, vector<16x16xf32>, vector<16x16xf32> -> vector<16x16xf32>
    %cst_59 = arith.constant 0.000000e+00 : f32
    %89 = vector.broadcast %cst_59 : f32 to vector<16x16xf32>
    %90 = arith.maximumf %88, %89 : vector<16x16xf32>
    %91 = math.absf %88 : vector<16x16xf32>
    %cst_60 = arith.constant 0.000000e+00 : f32
    %92 = vector.broadcast %cst_60 : f32 to vector<16x16xf32>
    %93 = arith.subf %92, %91 : vector<16x16xf32>
    %94 = math.exp %93 : vector<16x16xf32>
    %95 = math.log1p %94 : vector<16x16xf32>
    %96 = arith.addf %90, %95 : vector<16x16xf32>
    %97 = arith.subf %96, %88 : vector<16x16xf32>
    %c0_61 = arith.constant 0 : index
    %c0_62 = arith.constant 0 : index
    %98 = vector.load %arg3[%c0_61, %c0_62] : memref<16x16xf32, #tpu.memory_space<vmem>>, vector<16x16xf32>
    %c0_63 = arith.constant 0 : index
    %c0_64 = arith.constant 0 : index
    %99 = vector.load %arg4[%c0_63, %c0_64] : memref<16x16xf32, #tpu.memory_space<vmem>>, vector<16x16xf32>
    %100 = arith.mulf %99, %97 : vector<16x16xf32>
    %101 = arith.subf %98, %99 : vector<16x16xf32>
    %102 = arith.mulf %101, %96 : vector<16x16xf32>
    %103 = arith.addf %100, %102 : vector<16x16xf32>
    %c0_65 = arith.constant 0 : index
    %c0_66 = arith.constant 0 : index
    %104 = vector.load %arg5[%c0_65, %c0_66] : memref<16x16xf32, #tpu.memory_space<vmem>>, vector<16x16xf32>
    %105 = arith.mulf %104, %96 : vector<16x16xf32>
    %cst_67 = arith.constant 2.000000e+00 : f32
    %106 = vector.broadcast %cst_67 : f32 to vector<16x8xf32>
    %107 = arith.mulf %106, %45 : vector<16x8xf32>
    %cst_68 = arith.constant 1.000000e+00 : f32
    %108 = vector.broadcast %cst_68 : f32 to vector<16x8xf32>
    %109 = arith.addf %108, %107 : vector<16x8xf32>
    %110 = arith.mulf %42, %42 : vector<16x8xf32>
    %111 = arith.subf %109, %110 : vector<16x8xf32>
    %cst_69 = arith.constant 2.000000e+00 : f32
    %112 = vector.broadcast %cst_69 : f32 to vector<16x8xf32>
    %113 = arith.mulf %112, %45 : vector<16x8xf32>
    %114 = math.exp %113 : vector<16x8xf32>
    %115 = arith.subf %111, %114 : vector<16x8xf32>
    %cst_70 = arith.constant dense<0.000000e+00> : vector<16xf32>
    %116 = vector.multi_reduction <add>, %103, %cst_70 [1] : vector<16x16xf32> to vector<16xf32>
    %117 = vector.shape_cast %116 : vector<16xf32> to vector<16x1xf32>
    %cst_71 = arith.constant dense<0.000000e+00> : vector<1xf32>
    %118 = vector.multi_reduction <add>, %117, %cst_71 [0] : vector<16x1xf32> to vector<1xf32>
    %119 = vector.shape_cast %118 : vector<1xf32> to vector<1x1xf32>
    %cst_72 = arith.constant 2.500000e-02 : f32
    %120 = vector.broadcast %cst_72 : f32 to vector<1x1xf32>
    %121 = arith.mulf %119, %120 : vector<1x1xf32>
    %cst_73 = arith.constant dense<0.000000e+00> : vector<16xf32>
    %122 = vector.multi_reduction <add>, %105, %cst_73 [1] : vector<16x16xf32> to vector<16xf32>
    %123 = vector.shape_cast %122 : vector<16xf32> to vector<16x1xf32>
    %cst_74 = arith.constant dense<0.000000e+00> : vector<1xf32>
    %124 = vector.multi_reduction <add>, %123, %cst_74 [0] : vector<16x1xf32> to vector<1xf32>
    %125 = vector.shape_cast %124 : vector<1xf32> to vector<1x1xf32>
    %cst_75 = arith.constant 0.0178571437 : f32
    %126 = vector.broadcast %cst_75 : f32 to vector<1x1xf32>
    %127 = arith.mulf %125, %126 : vector<1x1xf32>
    %128 = arith.addf %121, %127 : vector<1x1xf32>
    %cst_76 = arith.constant dense<0.000000e+00> : vector<16xf32>
    %129 = vector.multi_reduction <add>, %115, %cst_76 [1] : vector<16x8xf32> to vector<16xf32>
    %130 = vector.shape_cast %129 : vector<16xf32> to vector<16x1xf32>
    %cst_77 = arith.constant dense<0.000000e+00> : vector<1xf32>
    %131 = vector.multi_reduction <add>, %130, %cst_77 [0] : vector<16x1xf32> to vector<1xf32>
    %132 = vector.shape_cast %131 : vector<1xf32> to vector<1x1xf32>
    %cst_78 = arith.constant 5.000000e-01 : f32
    %133 = vector.broadcast %cst_78 : f32 to vector<1x1xf32>
    %134 = arith.mulf %133, %132 : vector<1x1xf32>
    %cst_79 = arith.constant 3.906250e-03 : f32
    %135 = vector.broadcast %cst_79 : f32 to vector<1x1xf32>
    %136 = arith.mulf %134, %135 : vector<1x1xf32>
    %137 = arith.subf %128, %136 : vector<1x1xf32>
    %c0_80 = arith.constant 0 : index
    %c0_81 = arith.constant 0 : index
    %138 = vector.load %arg21[%c0_80, %c0_81] : memref<1x1xf32, #tpu.memory_space<vmem>>, vector<1x1xf32>
    tpu.vector_store %arg21[%c0_80, %c0_81], %137 {strides = array<i32>} : memref<1x1xf32, #tpu.memory_space<vmem>>, vector<1x1xf32>,
    return
  }
  func.func @transform_0(%arg0: i32) -> (i32, i32) {
    %c0_i32 = arith.constant 0 : i32
    %c0_i32_0 = arith.constant 0 : i32
    %c0_i32_1 = arith.constant 0 : i32
    return %c0_i32, %c0_i32_0 : i32, i32
  }
  func.func @transform_1(%arg0: i32) -> (i32, i32) {
    %c0_i32 = arith.constant 0 : i32
    %c0_i32_0 = arith.constant 0 : i32
    %c0_i32_1 = arith.constant 0 : i32
    return %c0_i32, %c0_i32_0 : i32, i32
  }
  func.func @transform_2(%arg0: i32) -> (i32, i32) {
    %c0_i32 = arith.constant 0 : i32
    %c0_i32_0 = arith.constant 0 : i32
    %c0_i32_1 = arith.constant 0 : i32
    return %c0_i32, %c0_i32_0 : i32, i32
  }
  func.func @transform_3(%arg0: i32) -> (i32, i32) {
    %c0_i32 = arith.constant 0 : i32
    %c0_i32_0 = arith.constant 0 : i32
    %c0_i32_1 = arith.constant 0 : i32
    return %c0_i32, %c0_i32_0 : i32, i32
  }
  func.func @transform_4(%arg0: i32) -> (i32, i32) {
    %c0_i32 = arith.constant 0 : i32
    %c0_i32_0 = arith.constant 0 : i32
    %c0_i32_1 = arith.constant 0 : i32
    return %c0_i32, %c0_i32_0 : i32, i32
  }
  func.func @transform_5(%arg0: i32) -> (i32, i32) {
    %c0_i32 = arith.constant 0 : i32
    %c0_i32_0 = arith.constant 0 : i32
    %c0_i32_1 = arith.constant 0 : i32
    return %c0_i32, %c0_i32_0 : i32, i32
  }
  func.func @transform_6(%arg0: i32) -> (i32, i32) {
    %c0_i32 = arith.constant 0 : i32
    %c0_i32_0 = arith.constant 0 : i32
    %c0_i32_1 = arith.constant 0 : i32
    return %c0_i32, %c0_i32_0 : i32, i32
  }
  func.func @transform_7(%arg0: i32) -> (i32, i32) {
    %c0_i32 = arith.constant 0 : i32
    %c0_i32_0 = arith.constant 0 : i32
    %c0_i32_1 = arith.constant 0 : i32
    return %c0_i32, %c0_i32_0 : i32, i32
  }
  func.func @transform_8(%arg0: i32) -> (i32, i32) {
    %c0_i32 = arith.constant 0 : i32
    %c0_i32_0 = arith.constant 0 : i32
    %c0_i32_1 = arith.constant 0 : i32
    return %c0_i32, %c0_i32_0 : i32, i32
  }
  func.func @transform_9(%arg0: i32) -> (i32, i32) {
    %c0_i32 = arith.constant 0 : i32
    %c0_i32_0 = arith.constant 0 : i32
    %c0_i32_1 = arith.constant 0 : i32
    return %c0_i32, %c0_i32_0 : i32, i32
  }
  func.func @transform_10(%arg0: i32) -> (i32, i32) {
    %c0_i32 = arith.constant 0 : i32
    %c0_i32_0 = arith.constant 0 : i32
    %c0_i32_1 = arith.constant 0 : i32
    return %c0_i32, %c0_i32_0 : i32, i32
  }
  func.func @transform_11(%arg0: i32) -> (i32, i32) {
    %c0_i32 = arith.constant 0 : i32
    %c0_i32_0 = arith.constant 0 : i32
    %c0_i32_1 = arith.constant 0 : i32
    return %c0_i32, %c0_i32_0 : i32, i32
  }
  func.func @transform_12(%arg0: i32) -> (i32, i32) {
    %c0_i32 = arith.constant 0 : i32
    %c0_i32_0 = arith.constant 0 : i32
    %c0_i32_1 = arith.constant 0 : i32
    return %c0_i32, %c0_i32_0 : i32, i32
  }
  func.func @transform_13(%arg0: i32) -> (i32, i32) {
    %c0_i32 = arith.constant 0 : i32
    %c0_i32_0 = arith.constant 0 : i32
    %c0_i32_1 = arith.constant 0 : i32
    return %c0_i32, %c0_i32_0 : i32, i32
  }
  func.func @transform_14(%arg0: i32) -> (i32, i32) {
    %c0_i32 = arith.constant 0 : i32
    %c0_i32_0 = arith.constant 0 : i32
    %c0_i32_1 = arith.constant 0 : i32
    return %c0_i32, %c0_i32_0 : i32, i32
  }
  func.func @transform_15(%arg0: i32) -> (i32, i32) {
    %c0_i32 = arith.constant 0 : i32
    %c0_i32_0 = arith.constant 0 : i32
    %c0_i32_1 = arith.constant 0 : i32
    return %c0_i32, %c0_i32_0 : i32, i32
  }
  func.func @transform_16(%arg0: i32) -> (i32, i32) {
    %c0_i32 = arith.constant 0 : i32
    %c0_i32_0 = arith.constant 0 : i32
    %c0_i32_1 = arith.constant 0 : i32
    return %c0_i32, %c0_i32_0 : i32, i32
  }
  func.func @transform_17(%arg0: i32) -> (i32, i32) {
    %c0_i32 = arith.constant 0 : i32
    %c0_i32_0 = arith.constant 0 : i32
    %c0_i32_1 = arith.constant 0 : i32
    return %c0_i32, %c0_i32_0 : i32, i32
  }
  func.func @transform_18(%arg0: i32) -> (i32, i32) {
    %c0_i32 = arith.constant 0 : i32
    %c0_i32_0 = arith.constant 0 : i32
    %c0_i32_1 = arith.constant 0 : i32
    return %c0_i32, %c0_i32_0 : i32, i32
  }
  func.func @transform_19(%arg0: i32) -> (i32, i32) {
    %c0_i32 = arith.constant 0 : i32
    %c0_i32_0 = arith.constant 0 : i32
    %c0_i32_1 = arith.constant 0 : i32
    return %c0_i32, %c0_i32_0 : i32, i32
  }
  func.func @transform_20(%arg0: i32) -> (i32, i32) {
    %c0_i32 = arith.constant 0 : i32
    %c0_i32_0 = arith.constant 0 : i32
    %c0_i32_1 = arith.constant 0 : i32
    return %c0_i32, %c0_i32_0 : i32, i32
  }
}

</mosaic_0001>

<llo_original>
// kernel: tpu_custom_call.1
$region0: #{tpu_custom_call.1}
  #allocation0 [shape = 'u32[]', space=smem, size = 0x4, offset = 0x4, fixed_abs, tag = 'smem constant byte address 0x4 - core index']
  #allocation1 [shape = 'u32[144,128]{1,0:T(1,128)}', space=vmem, size = 0x12000, scoped, tag = 'internal scratch']
  %s0 = inlined_call_operand.vmem [shape: f32[16,32], index: 0, kind: input, shape index: {}]
  %s1 = inlined_call_operand.hbm [shape: f32[16,16], index: 1, kind: input, shape index: {}]
  %s2 = inlined_call_operand.hbm [shape: f32[16,16], index: 2, kind: input, shape index: {}]
  %s3 = inlined_call_operand.hbm [shape: f32[16,16], index: 3, kind: input, shape index: {}]
  %s4 = inlined_call_operand.hbm [shape: f32[16,16], index: 4, kind: input, shape index: {}]
  %s5 = inlined_call_operand.vmem [shape: f32[32,32], index: 5, kind: input, shape index: {}]
  %s6 = inlined_call_operand.vmem [shape: f32[1,32], index: 6, kind: input, shape index: {}]
  %s7 = inlined_call_operand.vmem [shape: f32[32,16], index: 7, kind: input, shape index: {}]
  %s8 = inlined_call_operand.hbm [shape: f32[1,16], index: 8, kind: input, shape index: {}]
  %s9 = inlined_call_operand.vmem [shape: f32[16,16], index: 9, kind: input, shape index: {}]
  %s10 = inlined_call_operand.hbm [shape: f32[1,16], index: 10, kind: input, shape index: {}]
  %s11 = inlined_call_operand.hbm [shape: f32[16,16], index: 11, kind: input, shape index: {}]
  %s12 = inlined_call_operand.hbm [shape: f32[1,16], index: 12, kind: input, shape index: {}]
  %s13 = inlined_call_operand.vmem [shape: f32[16,36], index: 13, kind: input, shape index: {}]
  %s14 = inlined_call_operand.hbm [shape: f32[8,36], index: 14, kind: input, shape index: {}]
  %s15 = inlined_call_operand.vmem [shape: f32[1,36], index: 15, kind: input, shape index: {}]
  %s16 = inlined_call_operand.hbm [shape: f32[16,32], index: 16, kind: input, shape index: {}]
  %s17 = inlined_call_operand.vmem [shape: f32[1,32], index: 17, kind: input, shape index: {}]
  %s18 = inlined_call_operand.vmem [shape: f32[16,4], index: 18, kind: output, shape index: {0}]
  %s19 = inlined_call_operand.hbm [shape: f32[1,1], index: 19, kind: output, shape index: {1}]
  %s20 = inlined_call_operand.hbm [shape: f32[1,1], index: 20, kind: output, shape index: {2}]
  %21 = xla_tuple %s18, %s19, %s20
  %s22 = sld [smem:[#allocation0]]
  $region138: #{tpu_custom_call.1} parent=0
    _
  %s24 = ssub.s32 1, %s22
  %s25 = scalar_select 0, %s24, %s22
  $region1: #{tpu_custom_call.1} parent=0
    #allocation2 [shape = 'u8[8192]{0}', space=vmem, size = 0x2000, scoped, tag = 'input window, operand 1, single buffered']
    #allocation3 [shape = 's32[1]{0}', space=sflag, size = 0x4, scoped, tag = 'scoped memory for tpu_custom_call.1']
    #allocation4 [shape = 's32[1]{0}', space=sflag, size = 0x4, scoped, tag = 'scoped memory for tpu_custom_call.1']
    #allocation5 [shape = 'u8[8192]{0}', space=vmem, size = 0x2000, scoped, tag = 'input window, operand 2, single buffered']
    #allocation6 [shape = 's32[1]{0}', space=sflag, size = 0x4, scoped, tag = 'scoped memory for tpu_custom_call.1']
    #allocation7 [shape = 'u8[8192]{0}', space=vmem, size = 0x2000, scoped, tag = 'input window, operand 3, single buffered']
    #allocation8 [shape = 'u8[8192]{0}', space=vmem, size = 0x2000, scoped, tag = 'input window, operand 4, single buffered']
    #allocation9 [shape = 's32[1]{0}', space=sflag, size = 0x4, scoped, tag = 'scoped memory for tpu_custom_call.1']
    #allocation10 [shape = 'u8[512]{0}', space=vmem, size = 0x400, scoped, tag = 'input window, operand 8, single buffered']
    #allocation11 [shape = 'u8[512]{0}', space=vmem, size = 0x400, scoped, tag = 'input window, operand 10, single buffered']
    #allocation12 [shape = 's32[1]{0}', space=sflag, size = 0x4, scoped, tag = 'scoped memory for tpu_custom_call.1']
    #allocation13 [shape = 'u8[8192]{0}', space=vmem, size = 0x2000, scoped, tag = 'input window, operand 11, single buffered']
    #allocation14 [shape = 'u8[512]{0}', space=vmem, size = 0x400, scoped, tag = 'input window, operand 12, single buffered']
    #allocation15 [shape = 's32[1]{0}', space=sflag, size = 0x4, scoped, tag = 'scoped memory for tpu_custom_call.1']
    #allocation16 [shape = 'u8[4096]{0}', space=vmem, size = 0x1000, scoped, tag = 'input window, operand 14, single buffered']
    #allocation17 [shape = 'u8[8192]{0}', space=vmem, size = 0x2000, scoped, tag = 'input window, operand 16, single buffered']
    #allocation18 [shape = 's32[1]{0}', space=sflag, size = 0x4, scoped, tag = 'scoped memory for tpu_custom_call.1']
    #allocation19 [shape = 'u8[512]{0}', space=vmem, size = 0x400, scoped, tag = 'output window, operand 1, single buffered']
    #allocation20 [shape = 'u8[512]{0}', space=vmem, size = 0x400, scoped, tag = 'output window, operand 2, single buffered']
    #allocation21 [shape = 's32[1]{0}', space=sflag, size = 0x4, scoped, tag = 'scoped memory for tpu_custom_call.1']
    %26 = vsyncpa [#allocation3], 0
    %27 = vsyncpa [#allocation6], 0
    %28 = vsyncpa [#allocation9], 0
    %29 = vsyncpa [#allocation12], 0
    %30 = vsyncpa [#allocation15], 0
    %31 = vsyncpa [#allocation18], 0
    %32 = vsyncpa [#allocation4], 0
    %33 = vsyncpa [#allocation21], 0
    // Predicated region
    $region2: #{tpu_custom_call.1} parent=1 // pred_check
      _
    $region3: #{tpu_custom_call.1} parent=1 // pred_check_branch
      %35 = sbr.rel (0) target = $region5
    $region4: #{tpu_custom_call.1} parent=1 // pred_region
      _
    $region5: #{tpu_custom_call.1} parent=1 // pred_fallthru
      _
    // Predicated region
    $region6: #{tpu_custom_call.1} parent=1 // pred_check
      _
    $region7: #{tpu_custom_call.1} parent=1 // pred_check_branch
      %37 = sbr.rel (0) target = $region9
    $region8: #{tpu_custom_call.1} parent=1 // pred_region
      %s39 = ssub.s32 256, 256
      %40 = vsyncadd [#allocation3], %s39
      %s41 = sshll.u32 [#allocation2], 4
      %s42 = int_to_ptr.vmem [resolvable:$true] %s41
      %47 = dma.hbm_to_vmem [thread:$0]  %s1, 256, %s42, [#allocation3], 128, 128, 8
    $region9: #{tpu_custom_call.1} parent=1 // pred_fallthru
      _
    // Predicated region
    $region10: #{tpu_custom_call.1} parent=1 // pred_check
      _
    $region11: #{tpu_custom_call.1} parent=1 // pred_check_branch
      %49 = sbr.rel (0) target = $region13
    $region12: #{tpu_custom_call.1} parent=1 // pred_region
      %s51 = ssub.s32 256, 256
      %52 = vsyncadd [#allocation6], %s51
      %s53 = sshll.u32 [#allocation5], 4
      %s54 = int_to_ptr.vmem [resolvable:$true] %s53
      %59 = dma.hbm_to_vmem [thread:$0]  %s2, 256, %s54, [#allocation6], 128, 128, 8
    $region13: #{tpu_custom_call.1} parent=1 // pred_fallthru
      _
    // Predicated region
    $region14: #{tpu_custom_call.1} parent=1 // pred_check
      _
    $region15: #{tpu_custom_call.1} parent=1 // pred_check_branch
      %61 = sbr.rel (0) target = $region17
    $region16: #{tpu_custom_call.1} parent=1 // pred_region
      %s63 = ssub.s32 256, 256
      %64 = vsyncadd [#allocation6], %s63
      %s65 = sshll.u32 [#allocation7], 4
      %s66 = int_to_ptr.vmem [resolvable:$true] %s65
      %71 = dma.hbm_to_vmem [thread:$0]  %s3, 256, %s66, [#allocation6], 128, 128, 8
    $region17: #{tpu_custom_call.1} parent=1 // pred_fallthru
      _
    // Predicated region
    $region18: #{tpu_custom_call.1} parent=1 // pred_check
      _
    $region19: #{tpu_custom_call.1} parent=1 // pred_check_branch
      %73 = sbr.rel (0) target = $region21
    $region20: #{tpu_custom_call.1} parent=1 // pred_region
      %s75 = ssub.s32 256, 256
      %76 = vsyncadd [#allocation9], %s75
      %s77 = sshll.u32 [#allocation8], 4
      %s78 = int_to_ptr.vmem [resolvable:$true] %s77
      %83 = dma.hbm_to_vmem [thread:$0]  %s4, 256, %s78, [#allocation9], 128, 128, 8
    $region21: #{tpu_custom_call.1} parent=1 // pred_fallthru
      _
    // Predicated region
    $region22: #{tpu_custom_call.1} parent=1 // pred_check
      _
    $region23: #{tpu_custom_call.1} parent=1 // pred_check_branch
      %85 = sbr.rel (0) target = $region25
    $region24: #{tpu_custom_call.1} parent=1 // pred_region
      _
    $region25: #{tpu_custom_call.1} parent=1 // pred_fallthru
      _
    // Predicated region
    $region26: #{tpu_custom_call.1} parent=1 // pred_check
      _
    $region27: #{tpu_custom_call.1} parent=1 // pred_check_branch
      %87 = sbr.rel (0) target = $region29
    $region28: #{tpu_custom_call.1} parent=1 // pred_region
      _
    $region29: #{tpu_custom_call.1} parent=1 // pred_fallthru
      _
    // Predicated region
    $region30: #{tpu_custom_call.1} parent=1 // pred_check
      _
    $region31: #{tpu_custom_call.1} parent=1 // pred_check_branch
      %89 = sbr.rel (0) target = $region33
    $region32: #{tpu_custom_call.1} parent=1 // pred_region
      _
    $region33: #{tpu_custom_call.1} parent=1 // pred_fallthru
      _
    // Predicated region
    $region34: #{tpu_custom_call.1} parent=1 // pred_check
      _
    $region35: #{tpu_custom_call.1} parent=1 // pred_check_branch
      %91 = sbr.rel (0) target = $region37
    $region36: #{tpu_custom_call.1} parent=1 // pred_region
      %s93 = ssub.s32 16, 16
      %94 = vsyncadd [#allocation9], %s93
      %s96 = sshll.u32 [#allocation10], 4
      %s97 = int_to_ptr.vmem [resolvable:$true] %s96
      %99 = dma.hbm_to_vmem [thread:$0]  %s8, 16, %s97, [#allocation9]
    $region37: #{tpu_custom_call.1} parent=1 // pred_fallthru
      _
    // Predicated region
    $region38: #{tpu_custom_call.1} parent=1 // pred_check
      _
    $region39: #{tpu_custom_call.1} parent=1 // pred_check_branch
      %101 = sbr.rel (0) target = $region41
    $region40: #{tpu_custom_call.1} parent=1 // pred_region
      _
    $region41: #{tpu_custom_call.1} parent=1 // pred_fallthru
      _
    // Predicated region
    $region42: #{tpu_custom_call.1} parent=1 // pred_check
      _
    $region43: #{tpu_custom_call.1} parent=1 // pred_check_branch
      %103 = sbr.rel (0) target = $region45
    $region44: #{tpu_custom_call.1} parent=1 // pred_region
      %s105 = ssub.s32 16, 16
      %106 = vsyncadd [#allocation12], %s105
      %s108 = sshll.u32 [#allocation11], 4
      %s109 = int_to_ptr.vmem [resolvable:$true] %s108
      %111 = dma.hbm_to_vmem [thread:$0]  %s10, 16, %s109, [#allocation12]
    $region45: #{tpu_custom_call.1} parent=1 // pred_fallthru
      _
    // Predicated region
    $region46: #{tpu_custom_call.1} parent=1 // pred_check
      _
    $region47: #{tpu_custom_call.1} parent=1 // pred_check_branch
      %113 = sbr.rel (0) target = $region49
    $region48: #{tpu_custom_call.1} parent=1 // pred_region
      %s115 = ssub.s32 256, 256
      %116 = vsyncadd [#allocation12], %s115
      %s117 = sshll.u32 [#allocation13], 4
      %s118 = int_to_ptr.vmem [resolvable:$true] %s117
      %123 = dma.hbm_to_vmem [thread:$0]  %s11, 256, %s118, [#allocation12], 128, 128, 8
    $region49: #{tpu_custom_call.1} parent=1 // pred_fallthru
      _
    // Predicated region
    $region50: #{tpu_custom_call.1} parent=1 // pred_check
      _
    $region51: #{tpu_custom_call.1} parent=1 // pred_check_branch
      %125 = sbr.rel (0) target = $region53
    $region52: #{tpu_custom_call.1} parent=1 // pred_region
      %s127 = ssub.s32 16, 16
      %128 = vsyncadd [#allocation15], %s127
      %s130 = sshll.u32 [#allocation14], 4
      %s131 = int_to_ptr.vmem [resolvable:$true] %s130
      %133 = dma.hbm_to_vmem [thread:$0]  %s12, 16, %s131, [#allocation15]
    $region53: #{tpu_custom_call.1} parent=1 // pred_fallthru
      _
    // Predicated region
    $region54: #{tpu_custom_call.1} parent=1 // pred_check
      _
    $region55: #{tpu_custom_call.1} parent=1 // pred_check_branch
      %135 = sbr.rel (0) target = $region57
    $region56: #{tpu_custom_call.1} parent=1 // pred_region
      _
    $region57: #{tpu_custom_call.1} parent=1 // pred_fallthru
      _
    // Predicated region
    $region58: #{tpu_custom_call.1} parent=1 // pred_check
      _
    $region59: #{tpu_custom_call.1} parent=1 // pred_check_branch
      %137 = sbr.rel (0) target = $region61
    $region60: #{tpu_custom_call.1} parent=1 // pred_region
      %s139 = ssub.s32 128, 128
      %140 = vsyncadd [#allocation15], %s139
      %s142 = sshll.u32 [#allocation16], 4
      %s143 = int_to_ptr.vmem [resolvable:$true] %s142
      %145 = dma.hbm_to_vmem [thread:$0]  %s14, 128, %s143, [#allocation15]
    $region61: #{tpu_custom_call.1} parent=1 // pred_fallthru
      _
    // Predicated region
    $region62: #{tpu_custom_call.1} parent=1 // pred_check
      _
    $region63: #{tpu_custom_call.1} parent=1 // pred_check_branch
      %147 = sbr.rel (0) target = $region65
    $region64: #{tpu_custom_call.1} parent=1 // pred_region
      _
    $region65: #{tpu_custom_call.1} parent=1 // pred_fallthru
      _
    // Predicated region
    $region66: #{tpu_custom_call.1} parent=1 // pred_check
      _
    $region67: #{tpu_custom_call.1} parent=1 // pred_check_branch
      %149 = sbr.rel (0) target = $region69
    $region68: #{tpu_custom_call.1} parent=1 // pred_region
      %s151 = ssub.s32 256, 256
      %152 = vsyncadd [#allocation18], %s151
      %s153 = sshll.u32 [#allocation17], 4
      %s154 = int_to_ptr.vmem [resolvable:$true] %s153
      %159 = dma.hbm_to_vmem [thread:$0]  %s16, 256, %s154, [#allocation18], 128, 128, 8
    $region69: #{tpu_custom_call.1} parent=1 // pred_fallthru
      _
    // Predicated region
    $region70: #{tpu_custom_call.1} parent=1 // pred_check
      _
    $region71: #{tpu_custom_call.1} parent=1 // pred_check_branch
      %161 = sbr.rel (0) target = $region73
    $region72: #{tpu_custom_call.1} parent=1 // pred_region
      _
    $region73: #{tpu_custom_call.1} parent=1 // pred_fallthru
      _
    // Predicated region
    $region74: #{tpu_custom_call.1} parent=1 // pred_check
      _
    $region75: #{tpu_custom_call.1} parent=1 // pred_check_branch
      %163 = sbr.rel (0) target = $region77
    $region76: #{tpu_custom_call.1} parent=1 // pred_region
      %164 = dma.done [#allocation3], 256
    $region77: #{tpu_custom_call.1} parent=1 // pred_fallthru
      _
    // Predicated region
    $region78: #{tpu_custom_call.1} parent=1 // pred_check
      _
    $region79: #{tpu_custom_call.1} parent=1 // pred_check_branch
      %166 = sbr.rel (0) target = $region81
    $region80: #{tpu_custom_call.1} parent=1 // pred_region
      %167 = dma.done [#allocation6], 256
    $region81: #{tpu_custom_call.1} parent=1 // pred_fallthru
      _
    // Predicated region
    $region82: #{tpu_custom_call.1} parent=1 // pred_check
      _
    $region83: #{tpu_custom_call.1} parent=1 // pred_check_branch
      %169 = sbr.rel (0) target = $region85
    $region84: #{tpu_custom_call.1} parent=1 // pred_region
      %170 = dma.done [#allocation6], 256
    $region85: #{tpu_custom_call.1} parent=1 // pred_fallthru
      _
    // Predicated region
    $region86: #{tpu_custom_call.1} parent=1 // pred_check
      _
    $region87: #{tpu_custom_call.1} parent=1 // pred_check_branch
      %172 = sbr.rel (0) target = $region89
    $region88: #{tpu_custom_call.1} parent=1 // pred_region
      %173 = dma.done [#allocation9], 256
    $region89: #{tpu_custom_call.1} parent=1 // pred_fallthru
      _
    // Predicated region
    $region90: #{tpu_custom_call.1} parent=1 // pred_check
      _
    $region91: #{tpu_custom_call.1} parent=1 // pred_check_branch
      %175 = sbr.rel (0) target = $region93
    $region92: #{tpu_custom_call.1} parent=1 // pred_region
      %176 = dma.done [#allocation9], 16
    $region93: #{tpu_custom_call.1} parent=1 // pred_fallthru
      _
    // Predicated region
    $region94: #{tpu_custom_call.1} parent=1 // pred_check
      _
    $region95: #{tpu_custom_call.1} parent=1 // pred_check_branch
      %178 = sbr.rel (0) target = $region97
    $region96: #{tpu_custom_call.1} parent=1 // pred_region
      %179 = dma.done [#allocation12], 16
    $region97: #{tpu_custom_call.1} parent=1 // pred_fallthru
      _
    // Predicated region
    $region98: #{tpu_custom_call.1} parent=1 // pred_check
      _
    $region99: #{tpu_custom_call.1} parent=1 // pred_check_branch
      %181 = sbr.rel (0) target = $region101
    $region100: #{tpu_custom_call.1} parent=1 // pred_region
      %182 = dma.done [#allocation12], 256
    $region101: #{tpu_custom_call.1} parent=1 // pred_fallthru
      _
    // Predicated region
    $region102: #{tpu_custom_call.1} parent=1 // pred_check
      _
    $region103: #{tpu_custom_call.1} parent=1 // pred_check_branch
      %184 = sbr.rel (0) target = $region105
    $region104: #{tpu_custom_call.1} parent=1 // pred_region
      %185 = dma.done [#allocation15], 16
    $region105: #{tpu_custom_call.1} parent=1 // pred_fallthru
      _
    // Predicated region
    $region106: #{tpu_custom_call.1} parent=1 // pred_check
      _
    $region107: #{tpu_custom_call.1} parent=1 // pred_check_branch
      %187 = sbr.rel (0) target = $region109
    $region108: #{tpu_custom_call.1} parent=1 // pred_region
      %188 = dma.done [#allocation15], 128
    $region109: #{tpu_custom_call.1} parent=1 // pred_fallthru
      _
    // Predicated region
    $region110: #{tpu_custom_call.1} parent=1 // pred_check
      _
    $region111: #{tpu_custom_call.1} parent=1 // pred_check_branch
      %190 = sbr.rel (0) target = $region113
    $region112: #{tpu_custom_call.1} parent=1 // pred_region
      %191 = dma.done [#allocation18], 256
    $region113: #{tpu_custom_call.1} parent=1 // pred_fallthru
      _
    %v192 = vld [vmem:[%s0] sm:$0xff]
    %v193 = vld [vmem:[%s0 + $0x8] sm:$0xff]
    %v194 = vld [vmem:[#allocation2] sm:$0xff]
    %v195 = vld [vmem:[#allocation2 + $0x8] sm:$0xff]
    %v196 = vld [vmem:[%s5] sm:$0xff]
    %v197 = vld [vmem:[%s5 + $0x8] sm:$0xff]
    %v198 = vld [vmem:[%s5 + $0x10] sm:$0xff]
    %v199 = vld [vmem:[%s5 + $0x18] sm:$0xff]
    %v200 = vld [vmem:[%s6] sm:$0x1]
    %v202 = vlaneseq
    %v203 = vshrl.u32 %v202, 7
    %v204 = vsub.s32 0, %v203
    %v205 = vrot.slane %v200, %v204
    %vm207 = vcmask 261120
    %v209 = vsel %vm207, %v192, 0
    %v212 = vsel %vm207, %v193, 0
    %214 = vmatprep.subr.mxu0 0.0
    %215 = vmatpush1.msra.mxu0 %v196
    %216 = vmatprep.subr.mxu0 0.0
    %217 = vmatpush1.msra.mxu0 %v197
    %218 = vmatprep.subr.mxu0 0.0
    %219 = vmatpush1.msra.mxu0 %v198
    %220 = vmatprep.subr.mxu0 0.0
    %221 = vmatpush1.msra.mxu0 %v199
    %222 = vmatprep.subr.mxu0 0.0
    %223 = vmatpush1.msra.mxu0 0.0
    %224 = vmatprep.subr.mxu0 0.0
    %225 = vmatpush1.msra.mxu0 0.0
    %226 = vmatprep.subr.mxu0 0.0
    %227 = vmatpush1.msra.mxu0 0.0
    %228 = vmatprep.subr.mxu0 0.0
    %229 = vmatpush1.msra.mxu0 0.0
    %230 = vmatprep.subr.mxu0 0.0
    %231 = vmatpush1.msra.mxu0 0.0
    %232 = vmatprep.subr.mxu0 0.0
    %233 = vmatpush1.msra.mxu0 0.0
    %234 = vmatprep.subr.mxu0 0.0
    %235 = vmatpush1.msra.mxu0 0.0
    %236 = vmatprep.subr.mxu0 0.0
    %237 = vmatpush1.msra.mxu0 0.0
    %238 = vmatprep.subr.mxu0 0.0
    %239 = vmatpush1.msra.mxu0 0.0
    %240 = vmatprep.subr.mxu0 0.0
    %241 = vmatpush1.msra.mxu0 0.0
    %242 = vmatprep.subr.mxu0 0.0
    %243 = vmatpush1.msra.mxu0 0.0
    %244 = vmatprep.subr.mxu0 0.0
    %245 = vmatpush1.msra.mxu0 0.0
    %246 = vmatprep.subr.mxu0 0.0
    %247 = vmatpush1.msra.mxu0 0.0
    %248 = vmatprep.subr.mxu0 0.0
    %249 = vmatpush1.msra.mxu0 0.0
    %250 = vmatprep.subr.mxu0 0.0
    %251 = vmatpush1.msra.mxu0 0.0
    %252 = vmatprep.subr.mxu0 0.0
    %253 = vmatpush1.msra.mxu0 0.0
    %254 = vmatprep.subr.mxu0 0.0
    %255 = vmatpush1.msra.mxu0 0.0
    %256 = vmatprep.subr.mxu0 0.0
    %257 = vmatpush1.msra.mxu0 0.0
    %258 = vmatprep.subr.mxu0 0.0
    %259 = vmatpush1.msra.mxu0 0.0
    %260 = vmatprep.subr.mxu0 0.0
    %261 = vmatpush1.msra.mxu0 0.0
    %262 = vmatprep.subr.mxu0 0.0
    %263 = vmatpush1.msra.mxu0 0.0
    %264 = vmatprep.subr.mxu0 0.0
    %265 = vmatpush1.msra.mxu0 0.0
    %266 = vmatprep.subr.mxu0 0.0
    %267 = vmatpush1.msra.mxu0 0.0
    %268 = vmatprep.subr.mxu0 0.0
    %269 = vmatpush1.msra.mxu0 0.0
    %270 = vmatprep.subr.mxu0 0.0
    %271 = vmatpush1.msra.mxu0 0.0
    %272 = vmatprep.subr.mxu0 0.0
    %273 = vmatpush1.msra.mxu0 0.0
    %274 = vmatprep.subr.mxu0 0.0
    %275 = vmatpush1.msra.mxu0 0.0
    %276 = vmatprep.subr.mxu0 0.0
    %277 = vmatpush1.msra.mxu0 0.0
    %278 = vmatprep.mubr.f32.mxu0 0.0
    %279 = vmatmul.mubr.f32.gmra.mrb[0].mxu0 %v209
    %v280 = vpop.f32.mrb[0].mxu0
    %v281 = vadd.f32 %v205, %v280
    %v282 = vpop.f32.mrb[0].mxu0
    %283 = vmatprep.mubr.f32.mxu0 0.0
    %284 = vmatmul.mubr.f32.gmra.mrb[0].mxu0 %v212
    %v285 = vpop.f32.mrb[0].mxu0
    %v286 = vadd.f32 %v205, %v285
    %v287 = vpop.f32.mrb[0].mxu0
    %288 = vdwg.mxu0
    %vm289 = vcmp.gt.f32.partialorder %v281, 0.0
    %vm290 = vcmp.gt.f32.partialorder %v286, 0.0
    %v291 = vmin.f32 %v281, 0.0
    %v292 = vmin.f32 %v286, 0.0
    %v293 = vmul.f32 %v291, 1.442695
    %v294 = vpow.pop %v293
    %v295 = vmul.f32 %v292, 1.442695
    %v296 = vpow.pop %v295
    %v297 = vsub.f32 %v294, 1.0
    %v298 = vsub.f32 %v296, 1.0
    %v299 = vsel %vm289, %v281, %v297
    %v300 = vsel %vm290, %v286, %v298
    %v301 = vld [vmem:[%s7] sm:$0xff]
    %v302 = vld [vmem:[%s7 + $0x8] sm:$0xff]
    %v303 = vld [vmem:[%s7 + $0x10] sm:$0xff]
    %v304 = vld [vmem:[%s7 + $0x18] sm:$0xff]
    %v305 = vld [vmem:[#allocation10] sm:$0x1]
    %v307 = vlaneseq
    %v308 = vshrl.u32 %v307, 7
    %v309 = vsub.s32 0, %v308
    %v310 = vrot.slane %v305, %v309
    %v313 = vsel %vm207, %v299, 0
    %v316 = vsel %vm207, %v300, 0
    %318 = vmatprep.subr.mxu0 0.0
    %319 = vmatpush1.msra.mxu0 %v301
    %320 = vmatprep.subr.mxu0 0.0
    %321 = vmatpush1.msra.mxu0 %v302
    %322 = vmatprep.subr.mxu0 0.0
    %323 = vmatpush1.msra.mxu0 %v303
    %324 = vmatprep.subr.mxu0 0.0
    %325 = vmatpush1.msra.mxu0 %v304
    %326 = vmatprep.subr.mxu0 0.0
    %327 = vmatpush1.msra.mxu0 0.0
    %328 = vmatprep.subr.mxu0 0.0
    %329 = vmatpush1.msra.mxu0 0.0
    %330 = vmatprep.subr.mxu0 0.0
    %331 = vmatpush1.msra.mxu0 0.0
    %332 = vmatprep.subr.mxu0 0.0
    %333 = vmatpush1.msra.mxu0 0.0
    %334 = vmatprep.subr.mxu0 0.0
    %335 = vmatpush1.msra.mxu0 0.0
    %336 = vmatprep.subr.mxu0 0.0
    %337 = vmatpush1.msra.mxu0 0.0
    %338 = vmatprep.subr.mxu0 0.0
    %339 = vmatpush1.msra.mxu0 0.0
    %340 = vmatprep.subr.mxu0 0.0
    %341 = vmatpush1.msra.mxu0 0.0
    %342 = vmatprep.subr.mxu0 0.0
    %343 = vmatpush1.msra.mxu0 0.0
    %344 = vmatprep.subr.mxu0 0.0
    %345 = vmatpush1.msra.mxu0 0.0
    %346 = vmatprep.subr.mxu0 0.0
    %347 = vmatpush1.msra.mxu0 0.0
    %348 = vmatprep.subr.mxu0 0.0
    %349 = vmatpush1.msra.mxu0 0.0
    %350 = vmatprep.subr.mxu0 0.0
    %351 = vmatpush1.msra.mxu0 0.0
    %352 = vmatprep.subr.mxu0 0.0
    %353 = vmatpush1.msra.mxu0 0.0
    %354 = vmatprep.subr.mxu0 0.0
    %355 = vmatpush1.msra.mxu0 0.0
    %356 = vmatprep.subr.mxu0 0.0
    %357 = vmatpush1.msra.mxu0 0.0
    %358 = vmatprep.subr.mxu0 0.0
    %359 = vmatpush1.msra.mxu0 0.0
    %360 = vmatprep.subr.mxu0 0.0
    %361 = vmatpush1.msra.mxu0 0.0
    %362 = vmatprep.subr.mxu0 0.0
    %363 = vmatpush1.msra.mxu0 0.0
    %364 = vmatprep.subr.mxu0 0.0
    %365 = vmatpush1.msra.mxu0 0.0
    %366 = vmatprep.subr.mxu0 0.0
    %367 = vmatpush1.msra.mxu0 0.0
    %368 = vmatprep.subr.mxu0 0.0
    %369 = vmatpush1.msra.mxu0 0.0
    %370 = vmatprep.subr.mxu0 0.0
    %371 = vmatpush1.msra.mxu0 0.0
    %372 = vmatprep.subr.mxu0 0.0
    %373 = vmatpush1.msra.mxu0 0.0
    %374 = vmatprep.subr.mxu0 0.0
    %375 = vmatpush1.msra.mxu0 0.0
    %376 = vmatprep.subr.mxu0 0.0
    %377 = vmatpush1.msra.mxu0 0.0
    %378 = vmatprep.subr.mxu0 0.0
    %379 = vmatpush1.msra.mxu0 0.0
    %380 = vmatprep.subr.mxu0 0.0
    %381 = vmatpush1.msra.mxu0 0.0
    %382 = vmatprep.mubr.f32.mxu0 0.0
    %383 = vmatmul.mubr.f32.gmra.mrb[0].mxu0 %v313
    %v384 = vpop.f32.mrb[0].mxu0
    %v385 = vadd.f32 %v310, %v384
    %v386 = vpop.f32.mrb[0].mxu0
    %387 = vmatprep.mubr.f32.mxu0 0.0
    %388 = vmatmul.mubr.f32.gmra.mrb[0].mxu0 %v316
    %v389 = vpop.f32.mrb[0].mxu0
    %v390 = vadd.f32 %v310, %v389
    %v391 = vpop.f32.mrb[0].mxu0
    %392 = vdwg.mxu0
    %vm393 = vcmp.gt.f32.partialorder %v385, 0.0
    %vm394 = vcmp.gt.f32.partialorder %v390, 0.0
    %v395 = vmin.f32 %v385, 0.0
    %v396 = vmin.f32 %v390, 0.0
    %v397 = vmul.f32 %v395, 1.442695
    %v398 = vpow.pop %v397
    %v399 = vmul.f32 %v396, 1.442695
    %v400 = vpow.pop %v399
    %v401 = vsub.f32 %v398, 1.0
    %v402 = vsub.f32 %v400, 1.0
    %v403 = vsel %vm393, %v385, %v401
    %v404 = vsel %vm394, %v390, %v402
    %v405 = vld [vmem:[%s9] sm:$0xff]
    %v406 = vld [vmem:[%s9 + $0x8] sm:$0xff]
    %vm407 = vcmask 130048
    %v409 = vsel %vm407, %v403, 0
    %v412 = vsel %vm407, %v404, 0
    %414 = vmatprep.subr.mxu0 0.0
    %415 = vmatpush1.msra.mxu0 %v405
    %416 = vmatprep.subr.mxu0 0.0
    %417 = vmatpush1.msra.mxu0 %v406
    %418 = vmatprep.subr.mxu0 0.0
    %419 = vmatpush1.msra.mxu0 0.0
    %420 = vmatprep.subr.mxu0 0.0
    %421 = vmatpush1.msra.mxu0 0.0
    %422 = vmatprep.subr.mxu0 0.0
    %423 = vmatpush1.msra.mxu0 0.0
    %424 = vmatprep.subr.mxu0 0.0
    %425 = vmatpush1.msra.mxu0 0.0
    %426 = vmatprep.subr.mxu0 0.0
    %427 = vmatpush1.msra.mxu0 0.0
    %428 = vmatprep.subr.mxu0 0.0
    %429 = vmatpush1.msra.mxu0 0.0
    %430 = vmatprep.subr.mxu0 0.0
    %431 = vmatpush1.msra.mxu0 0.0
    %432 = vmatprep.subr.mxu0 0.0
    %433 = vmatpush1.msra.mxu0 0.0
    %434 = vmatprep.subr.mxu0 0.0
    %435 = vmatpush1.msra.mxu0 0.0
    %436 = vmatprep.subr.mxu0 0.0
    %437 = vmatpush1.msra.mxu0 0.0
    %438 = vmatprep.subr.mxu0 0.0
    %439 = vmatpush1.msra.mxu0 0.0
    %440 = vmatprep.subr.mxu0 0.0
    %441 = vmatpush1.msra.mxu0 0.0
    %442 = vmatprep.subr.mxu0 0.0
    %443 = vmatpush1.msra.mxu0 0.0
    %444 = vmatprep.subr.mxu0 0.0
    %445 = vmatpush1.msra.mxu0 0.0
    %446 = vmatprep.subr.mxu0 0.0
    %447 = vmatpush1.msra.mxu0 0.0
    %448 = vmatprep.subr.mxu0 0.0
    %449 = vmatpush1.msra.mxu0 0.0
    %450 = vmatprep.subr.mxu0 0.0
    %451 = vmatpush1.msra.mxu0 0.0
    %452 = vmatprep.subr.mxu0 0.0
    %453 = vmatpush1.msra.mxu0 0.0
    %454 = vmatprep.subr.mxu0 0.0
    %455 = vmatpush1.msra.mxu0 0.0
    %456 = vmatprep.subr.mxu0 0.0
    %457 = vmatpush1.msra.mxu0 0.0
    %458 = vmatprep.subr.mxu0 0.0
    %459 = vmatpush1.msra.mxu0 0.0
    %460 = vmatprep.subr.mxu0 0.0
    %461 = vmatpush1.msra.mxu0 0.0
    %462 = vmatprep.subr.mxu0 0.0
    %463 = vmatpush1.msra.mxu0 0.0
    %464 = vmatprep.subr.mxu0 0.0
    %465 = vmatpush1.msra.mxu0 0.0
    %466 = vmatprep.subr.mxu0 0.0
    %467 = vmatpush1.msra.mxu0 0.0
    %468 = vmatprep.subr.mxu0 0.0
    %469 = vmatpush1.msra.mxu0 0.0
    %470 = vmatprep.subr.mxu0 0.0
    %471 = vmatpush1.msra.mxu0 0.0
    %472 = vmatprep.subr.mxu0 0.0
    %473 = vmatpush1.msra.mxu0 0.0
    %474 = vmatprep.subr.mxu0 0.0
    %475 = vmatpush1.msra.mxu0 0.0
    %476 = vmatprep.subr.mxu0 0.0
    %477 = vmatpush1.msra.mxu0 0.0
    %478 = vmatprep.mubr.f32.mxu0 0.0
    %479 = vmatmul.mubr.f32.gmra.mrb[0].mxu0 %v409
    %v480 = vpop.f32.mrb[0].mxu0
    %v481 = vadd.f32 0.0, %v480
    %v482 = vpop.f32.mrb[0].mxu0
    %483 = vmatprep.mubr.f32.mxu0 0.0
    %484 = vmatmul.mubr.f32.gmra.mrb[0].mxu0 %v412
    %v485 = vpop.f32.mrb[0].mxu0
    %v486 = vadd.f32 0.0, %v485
    %v487 = vpop.f32.mrb[0].mxu0
    %488 = vdwg.mxu0
    %v489 = vld [vmem:[#allocation11] sm:$0x1]
    %v491 = vlaneseq
    %v492 = vshrl.u32 %v491, 7
    %v493 = vsub.s32 0, %v492
    %v494 = vrot.slane %v489, %v493
    %v497 = vsel %vm407, %v194, 0
    %v500 = vsel %vm407, %v195, 0
    %502 = vmatprep.subr.mxu0 0.0
    %503 = vmatpush1.msra.mxu0 %v481
    %504 = vmatprep.subr.mxu0 0.0
    %505 = vmatpush1.msra.mxu0 %v486
    %506 = vmatprep.subr.mxu0 0.0
    %507 = vmatpush1.msra.mxu0 0.0
    %508 = vmatprep.subr.mxu0 0.0
    %509 = vmatpush1.msra.mxu0 0.0
    %510 = vmatprep.subr.mxu0 0.0
    %511 = vmatpush1.msra.mxu0 0.0
    %512 = vmatprep.subr.mxu0 0.0
    %513 = vmatpush1.msra.mxu0 0.0
    %514 = vmatprep.subr.mxu0 0.0
    %515 = vmatpush1.msra.mxu0 0.0
    %516 = vmatprep.subr.mxu0 0.0
    %517 = vmatpush1.msra.mxu0 0.0
    %518 = vmatprep.subr.mxu0 0.0
    %519 = vmatpush1.msra.mxu0 0.0
    %520 = vmatprep.subr.mxu0 0.0
    %521 = vmatpush1.msra.mxu0 0.0
    %522 = vmatprep.subr.mxu0 0.0
    %523 = vmatpush1.msra.mxu0 0.0
    %524 = vmatprep.subr.mxu0 0.0
    %525 = vmatpush1.msra.mxu0 0.0
    %526 = vmatprep.subr.mxu0 0.0
    %527 = vmatpush1.msra.mxu0 0.0
    %528 = vmatprep.subr.mxu0 0.0
    %529 = vmatpush1.msra.mxu0 0.0
    %530 = vmatprep.subr.mxu0 0.0
    %531 = vmatpush1.msra.mxu0 0.0
    %532 = vmatprep.subr.mxu0 0.0
    %533 = vmatpush1.msra.mxu0 0.0
    %534 = vmatprep.subr.mxu0 0.0
    %535 = vmatpush1.msra.mxu0 0.0
    %536 = vmatprep.subr.mxu0 0.0
    %537 = vmatpush1.msra.mxu0 0.0
    %538 = vmatprep.subr.mxu0 0.0
    %539 = vmatpush1.msra.mxu0 0.0
    %540 = vmatprep.subr.mxu0 0.0
    %541 = vmatpush1.msra.mxu0 0.0
    %542 = vmatprep.subr.mxu0 0.0
    %543 = vmatpush1.msra.mxu0 0.0
    %544 = vmatprep.subr.mxu0 0.0
    %545 = vmatpush1.msra.mxu0 0.0
    %546 = vmatprep.subr.mxu0 0.0
    %547 = vmatpush1.msra.mxu0 0.0
    %548 = vmatprep.subr.mxu0 0.0
    %549 = vmatpush1.msra.mxu0 0.0
    %550 = vmatprep.subr.mxu0 0.0
    %551 = vmatpush1.msra.mxu0 0.0
    %552 = vmatprep.subr.mxu0 0.0
    %553 = vmatpush1.msra.mxu0 0.0
    %554 = vmatprep.subr.mxu0 0.0
    %555 = vmatpush1.msra.mxu0 0.0
    %556 = vmatprep.subr.mxu0 0.0
    %557 = vmatpush1.msra.mxu0 0.0
    %558 = vmatprep.subr.mxu0 0.0
    %559 = vmatpush1.msra.mxu0 0.0
    %560 = vmatprep.subr.mxu0 0.0
    %561 = vmatpush1.msra.mxu0 0.0
    %562 = vmatprep.subr.mxu0 0.0
    %563 = vmatpush1.msra.mxu0 0.0
    %564 = vmatprep.subr.mxu0 0.0
    %565 = vmatpush1.msra.mxu0 0.0
    %566 = vmatprep.mubr.f32.mxu0 0.0
    %567 = vmatmul.mubr.f32.gmra.mrb[0].mxu0 %v497
    %v568 = vpop.f32.mrb[0].mxu0
    %v569 = vadd.f32 %v494, %v568
    %v570 = vpop.f32.mrb[0].mxu0
    %571 = vmatprep.mubr.f32.mxu0 0.0
    %572 = vmatmul.mubr.f32.gmra.mrb[0].mxu0 %v500
    %v573 = vpop.f32.mrb[0].mxu0
    %v574 = vadd.f32 %v494, %v573
    %v575 = vpop.f32.mrb[0].mxu0
    %576 = vdwg.mxu0
    %v577 = vmax.f32 %v569, 0.0
    %v578 = vmax.f32 %v574, 0.0
    %v579 = vld [vmem:[#allocation13] sm:$0xff]
    %v580 = vld [vmem:[#allocation13 + $0x8] sm:$0xff]
    %v582 = vsel %vm407, %v577, 0
    %v585 = vsel %vm407, %v578, 0
    %587 = vmatprep.subr.mxu0 0.0
    %588 = vmatpush1.msra.mxu0 %v579
    %589 = vmatprep.subr.mxu0 0.0
    %590 = vmatpush1.msra.mxu0 %v580
    %591 = vmatprep.subr.mxu0 0.0
    %592 = vmatpush1.msra.mxu0 0.0
    %593 = vmatprep.subr.mxu0 0.0
    %594 = vmatpush1.msra.mxu0 0.0
    %595 = vmatprep.subr.mxu0 0.0
    %596 = vmatpush1.msra.mxu0 0.0
    %597 = vmatprep.subr.mxu0 0.0
    %598 = vmatpush1.msra.mxu0 0.0
    %599 = vmatprep.subr.mxu0 0.0
    %600 = vmatpush1.msra.mxu0 0.0
    %601 = vmatprep.subr.mxu0 0.0
    %602 = vmatpush1.msra.mxu0 0.0
    %603 = vmatprep.subr.mxu0 0.0
    %604 = vmatpush1.msra.mxu0 0.0
    %605 = vmatprep.subr.mxu0 0.0
    %606 = vmatpush1.msra.mxu0 0.0
    %607 = vmatprep.subr.mxu0 0.0
    %608 = vmatpush1.msra.mxu0 0.0
    %609 = vmatprep.subr.mxu0 0.0
    %610 = vmatpush1.msra.mxu0 0.0
    %611 = vmatprep.subr.mxu0 0.0
    %612 = vmatpush1.msra.mxu0 0.0
    %613 = vmatprep.subr.mxu0 0.0
    %614 = vmatpush1.msra.mxu0 0.0
    %615 = vmatprep.subr.mxu0 0.0
    %616 = vmatpush1.msra.mxu0 0.0
    %617 = vmatprep.subr.mxu0 0.0
    %618 = vmatpush1.msra.mxu0 0.0
    %619 = vmatprep.subr.mxu0 0.0
    %620 = vmatpush1.msra.mxu0 0.0
    %621 = vmatprep.subr.mxu0 0.0
    %622 = vmatpush1.msra.mxu0 0.0
    %623 = vmatprep.subr.mxu0 0.0
    %624 = vmatpush1.msra.mxu0 0.0
    %625 = vmatprep.subr.mxu0 0.0
    %626 = vmatpush1.msra.mxu0 0.0
    %627 = vmatprep.subr.mxu0 0.0
    %628 = vmatpush1.msra.mxu0 0.0
    %629 = vmatprep.subr.mxu0 0.0
    %630 = vmatpush1.msra.mxu0 0.0
    %631 = vmatprep.subr.mxu0 0.0
    %632 = vmatpush1.msra.mxu0 0.0
    %633 = vmatprep.subr.mxu0 0.0
    %634 = vmatpush1.msra.mxu0 0.0
    %635 = vmatprep.subr.mxu0 0.0
    %636 = vmatpush1.msra.mxu0 0.0
    %637 = vmatprep.subr.mxu0 0.0
    %638 = vmatpush1.msra.mxu0 0.0
    %639 = vmatprep.subr.mxu0 0.0
    %640 = vmatpush1.msra.mxu0 0.0
    %641 = vmatprep.subr.mxu0 0.0
    %642 = vmatpush1.msra.mxu0 0.0
    %643 = vmatprep.subr.mxu0 0.0
    %644 = vmatpush1.msra.mxu0 0.0
    %645 = vmatprep.subr.mxu0 0.0
    %646 = vmatpush1.msra.mxu0 0.0
    %647 = vmatprep.subr.mxu0 0.0
    %648 = vmatpush1.msra.mxu0 0.0
    %649 = vmatprep.subr.mxu0 0.0
    %650 = vmatpush1.msra.mxu0 0.0
    %651 = vmatprep.mubr.f32.mxu0 0.0
    %652 = vmatmul.mubr.f32.gmra.mrb[0].mxu0 %v582
    %v653 = vpop.f32.mrb[0].mxu0
    %v654 = vadd.f32 0.0, %v653
    %v655 = vpop.f32.mrb[0].mxu0
    %656 = vmatprep.mubr.f32.mxu0 0.0
    %657 = vmatmul.mubr.f32.gmra.mrb[0].mxu0 %v585
    %v658 = vpop.f32.mrb[0].mxu0
    %v659 = vadd.f32 0.0, %v658
    %v660 = vpop.f32.mrb[0].mxu0
    %661 = vdwg.mxu0
    %v662 = vld [vmem:[#allocation14] sm:$0x1]
    %v664 = vlaneseq
    %v665 = vshrl.u32 %v664, 7
    %v666 = vsub.s32 0, %v665
    %v667 = vrot.slane %v662, %v666
    %669 = vmatprep.subr.mxu0 0.0
    %670 = vmatpush1.msra.mxu0 %v654
    %671 = vmatprep.subr.mxu0 0.0
    %672 = vmatpush1.msra.mxu0 %v659
    %673 = vmatprep.subr.mxu0 0.0
    %674 = vmatpush1.msra.mxu0 0.0
    %675 = vmatprep.subr.mxu0 0.0
    %676 = vmatpush1.msra.mxu0 0.0
    %677 = vmatprep.subr.mxu0 0.0
    %678 = vmatpush1.msra.mxu0 0.0
    %679 = vmatprep.subr.mxu0 0.0
    %680 = vmatpush1.msra.mxu0 0.0
    %681 = vmatprep.subr.mxu0 0.0
    %682 = vmatpush1.msra.mxu0 0.0
    %683 = vmatprep.subr.mxu0 0.0
    %684 = vmatpush1.msra.mxu0 0.0
    %685 = vmatprep.subr.mxu0 0.0
    %686 = vmatpush1.msra.mxu0 0.0
    %687 = vmatprep.subr.mxu0 0.0
    %688 = vmatpush1.msra.mxu0 0.0
    %689 = vmatprep.subr.mxu0 0.0
    %690 = vmatpush1.msra.mxu0 0.0
    %691 = vmatprep.subr.mxu0 0.0
    %692 = vmatpush1.msra.mxu0 0.0
    %693 = vmatprep.subr.mxu0 0.0
    %694 = vmatpush1.msra.mxu0 0.0
    %695 = vmatprep.subr.mxu0 0.0
    %696 = vmatpush1.msra.mxu0 0.0
    %697 = vmatprep.subr.mxu0 0.0
    %698 = vmatpush1.msra.mxu0 0.0
    %699 = vmatprep.subr.mxu0 0.0
    %700 = vmatpush1.msra.mxu0 0.0
    %701 = vmatprep.subr.mxu0 0.0
    %702 = vmatpush1.msra.mxu0 0.0
    %703 = vmatprep.subr.mxu0 0.0
    %704 = vmatpush1.msra.mxu0 0.0
    %705 = vmatprep.subr.mxu0 0.0
    %706 = vmatpush1.msra.mxu0 0.0
    %707 = vmatprep.subr.mxu0 0.0
    %708 = vmatpush1.msra.mxu0 0.0
    %709 = vmatprep.subr.mxu0 0.0
    %710 = vmatpush1.msra.mxu0 0.0
    %711 = vmatprep.subr.mxu0 0.0
    %712 = vmatpush1.msra.mxu0 0.0
    %713 = vmatprep.subr.mxu0 0.0
    %714 = vmatpush1.msra.mxu0 0.0
    %715 = vmatprep.subr.mxu0 0.0
    %716 = vmatpush1.msra.mxu0 0.0
    %717 = vmatprep.subr.mxu0 0.0
    %718 = vmatpush1.msra.mxu0 0.0
    %719 = vmatprep.subr.mxu0 0.0
    %720 = vmatpush1.msra.mxu0 0.0
    %721 = vmatprep.subr.mxu0 0.0
    %722 = vmatpush1.msra.mxu0 0.0
    %723 = vmatprep.subr.mxu0 0.0
    %724 = vmatpush1.msra.mxu0 0.0
    %725 = vmatprep.subr.mxu0 0.0
    %726 = vmatpush1.msra.mxu0 0.0
    %727 = vmatprep.subr.mxu0 0.0
    %728 = vmatpush1.msra.mxu0 0.0
    %729 = vmatprep.subr.mxu0 0.0
    %730 = vmatpush1.msra.mxu0 0.0
    %731 = vmatprep.subr.mxu0 0.0
    %732 = vmatpush1.msra.mxu0 0.0
    %733 = vmatprep.mubr.f32.mxu0 0.0
    %734 = vmatmul.mubr.f32.gmra.mrb[0].mxu0 %v497
    %v735 = vpop.f32.mrb[0].mxu0
    %v736 = vadd.f32 %v667, %v735
    %v737 = vpop.f32.mrb[0].mxu0
    %738 = vmatprep.mubr.f32.mxu0 0.0
    %739 = vmatmul.mubr.f32.gmra.mrb[0].mxu0 %v500
    %v740 = vpop.f32.mrb[0].mxu0
    %v741 = vadd.f32 %v667, %v740
    %v742 = vpop.f32.mrb[0].mxu0
    %743 = vdwg.mxu0
    %v744 = vmin.f32 %v736, 10.0
    %v745 = vmin.f32 %v741, 10.0
    %v746 = vld [vmem:[%s13] sm:$0xff]
    %v747 = vld [vmem:[%s13 + $0x8] sm:$0xff]
    %v748 = vld [vmem:[#allocation16] sm:$0xff]
    %vm749 = vcmask 64512
    %v751 = vsel %vm749, %v736, 0
    %v754 = vsel %vm749, %v741, 0
    %756 = vmatprep.subr.mxu0 0.0
    %757 = vmatpush1.msra.mxu0 %v748
    %758 = vmatprep.subr.mxu0 0.0
    %759 = vmatpush1.msra.mxu0 0.0
    %760 = vmatprep.subr.mxu0 0.0
    %761 = vmatpush1.msra.mxu0 0.0
    %762 = vmatprep.subr.mxu0 0.0
    %763 = vmatpush1.msra.mxu0 0.0
    %764 = vmatprep.subr.mxu0 0.0
    %765 = vmatpush1.msra.mxu0 0.0
    %766 = vmatprep.subr.mxu0 0.0
    %767 = vmatpush1.msra.mxu0 0.0
    %768 = vmatprep.subr.mxu0 0.0
    %769 = vmatpush1.msra.mxu0 0.0
    %770 = vmatprep.subr.mxu0 0.0
    %771 = vmatpush1.msra.mxu0 0.0
    %772 = vmatprep.subr.mxu0 0.0
    %773 = vmatpush1.msra.mxu0 0.0
    %774 = vmatprep.subr.mxu0 0.0
    %775 = vmatpush1.msra.mxu0 0.0
    %776 = vmatprep.subr.mxu0 0.0
    %777 = vmatpush1.msra.mxu0 0.0
    %778 = vmatprep.subr.mxu0 0.0
    %779 = vmatpush1.msra.mxu0 0.0
    %780 = vmatprep.subr.mxu0 0.0
    %781 = vmatpush1.msra.mxu0 0.0
    %782 = vmatprep.subr.mxu0 0.0
    %783 = vmatpush1.msra.mxu0 0.0
    %784 = vmatprep.subr.mxu0 0.0
    %785 = vmatpush1.msra.mxu0 0.0
    %786 = vmatprep.subr.mxu0 0.0
    %787 = vmatpush1.msra.mxu0 0.0
    %788 = vmatprep.subr.mxu0 0.0
    %789 = vmatpush1.msra.mxu0 0.0
    %790 = vmatprep.subr.mxu0 0.0
    %791 = vmatpush1.msra.mxu0 0.0
    %792 = vmatprep.subr.mxu0 0.0
    %793 = vmatpush1.msra.mxu0 0.0
    %794 = vmatprep.subr.mxu0 0.0
    %795 = vmatpush1.msra.mxu0 0.0
    %796 = vmatprep.subr.mxu0 0.0
    %797 = vmatpush1.msra.mxu0 0.0
    %798 = vmatprep.subr.mxu0 0.0
    %799 = vmatpush1.msra.mxu0 0.0
    %800 = vmatprep.subr.mxu0 0.0
    %801 = vmatpush1.msra.mxu0 0.0
    %802 = vmatprep.subr.mxu0 0.0
    %803 = vmatpush1.msra.mxu0 0.0
    %804 = vmatprep.subr.mxu0 0.0
    %805 = vmatpush1.msra.mxu0 0.0
    %806 = vmatprep.subr.mxu0 0.0
    %807 = vmatpush1.msra.mxu0 0.0
    %808 = vmatprep.subr.mxu0 0.0
    %809 = vmatpush1.msra.mxu0 0.0
    %810 = vmatprep.subr.mxu0 0.0
    %811 = vmatpush1.msra.mxu0 0.0
    %812 = vmatprep.subr.mxu0 0.0
    %813 = vmatpush1.msra.mxu0 0.0
    %814 = vmatprep.subr.mxu0 0.0
    %815 = vmatpush1.msra.mxu0 0.0
    %816 = vmatprep.subr.mxu0 0.0
    %817 = vmatpush1.msra.mxu0 0.0
    %818 = vmatprep.subr.mxu0 0.0
    %819 = vmatpush1.msra.mxu0 0.0
    %820 = vmatprep.mubr.f32.mxu0 0.0
    %821 = vmatmul.mubr.f32.gmra.mrb[0].mxu0 %v751
    %v822 = vpop.f32.mrb[0].mxu0
    %v823 = vadd.f32 0.0, %v822
    %v824 = vpop.f32.mrb[0].mxu0
    %825 = vmatprep.mubr.f32.mxu0 0.0
    %826 = vmatmul.mubr.f32.gmra.mrb[0].mxu0 %v754
    %v827 = vpop.f32.mrb[0].mxu0
    %v828 = vadd.f32 0.0, %v827
    %v829 = vpop.f32.mrb[0].mxu0
    %830 = vdwg.mxu0
    %831 = vmatprep.subr.mxu0 0.0
    %832 = vmatpush1.msra.mxu0 %v746
    %833 = vmatprep.subr.mxu0 0.0
    %834 = vmatpush1.msra.mxu0 %v747
    %835 = vmatprep.subr.mxu0 0.0
    %836 = vmatpush1.msra.mxu0 0.0
    %837 = vmatprep.subr.mxu0 0.0
    %838 = vmatpush1.msra.mxu0 0.0
    %839 = vmatprep.subr.mxu0 0.0
    %840 = vmatpush1.msra.mxu0 0.0
    %841 = vmatprep.subr.mxu0 0.0
    %842 = vmatpush1.msra.mxu0 0.0
    %843 = vmatprep.subr.mxu0 0.0
    %844 = vmatpush1.msra.mxu0 0.0
    %845 = vmatprep.subr.mxu0 0.0
    %846 = vmatpush1.msra.mxu0 0.0
    %847 = vmatprep.subr.mxu0 0.0
    %848 = vmatpush1.msra.mxu0 0.0
    %849 = vmatprep.subr.mxu0 0.0
    %850 = vmatpush1.msra.mxu0 0.0
    %851 = vmatprep.subr.mxu0 0.0
    %852 = vmatpush1.msra.mxu0 0.0
    %853 = vmatprep.subr.mxu0 0.0
    %854 = vmatpush1.msra.mxu0 0.0
    %855 = vmatprep.subr.mxu0 0.0
    %856 = vmatpush1.msra.mxu0 0.0
    %857 = vmatprep.subr.mxu0 0.0
    %858 = vmatpush1.msra.mxu0 0.0
    %859 = vmatprep.subr.mxu0 0.0
    %860 = vmatpush1.msra.mxu0 0.0
    %861 = vmatprep.subr.mxu0 0.0
    %862 = vmatpush1.msra.mxu0 0.0
    %863 = vmatprep.subr.mxu0 0.0
    %864 = vmatpush1.msra.mxu0 0.0
    %865 = vmatprep.subr.mxu0 0.0
    %866 = vmatpush1.msra.mxu0 0.0
    %867 = vmatprep.subr.mxu0 0.0
    %868 = vmatpush1.msra.mxu0 0.0
    %869 = vmatprep.subr.mxu0 0.0
    %870 = vmatpush1.msra.mxu0 0.0
    %871 = vmatprep.subr.mxu0 0.0
    %872 = vmatpush1.msra.mxu0 0.0
    %873 = vmatprep.subr.mxu0 0.0
    %874 = vmatpush1.msra.mxu0 0.0
    %875 = vmatprep.subr.mxu0 0.0
    %876 = vmatpush1.msra.mxu0 0.0
    %877 = vmatprep.subr.mxu0 0.0
    %878 = vmatpush1.msra.mxu0 0.0
    %879 = vmatprep.subr.mxu0 0.0
    %880 = vmatpush1.msra.mxu0 0.0
    %881 = vmatprep.subr.mxu0 0.0
    %882 = vmatpush1.msra.mxu0 0.0
    %883 = vmatprep.subr.mxu0 0.0
    %884 = vmatpush1.msra.mxu0 0.0
    %885 = vmatprep.subr.mxu0 0.0
    %886 = vmatpush1.msra.mxu0 0.0
    %887 = vmatprep.subr.mxu0 0.0
    %888 = vmatpush1.msra.mxu0 0.0
    %889 = vmatprep.subr.mxu0 0.0
    %890 = vmatpush1.msra.mxu0 0.0
    %891 = vmatprep.subr.mxu0 0.0
    %892 = vmatpush1.msra.mxu0 0.0
    %893 = vmatprep.subr.mxu0 0.0
    %894 = vmatpush1.msra.mxu0 0.0
    %895 = vmatprep.mubr.f32.mxu0 0.0
    %896 = vmatmul.mubr.f32.gmra.mrb[0].mxu0 %v409
    %v897 = vpop.f32.mrb[0].mxu0
    %v898 = vadd.f32 %v823, %v897
    %v899 = vpop.f32.mrb[0].mxu0
    %900 = vmatprep.mubr.f32.mxu0 0.0
    %901 = vmatmul.mubr.f32.gmra.mrb[0].mxu0 %v412
    %v902 = vpop.f32.mrb[0].mxu0
    %v903 = vadd.f32 %v828, %v902
    %v904 = vpop.f32.mrb[0].mxu0
    %905 = vdwg.mxu0
    %v906 = vld [vmem:[%s15] sm:$0x1]
    %v908 = vlaneseq
    %v909 = vshrl.u32 %v908, 7
    %v910 = vsub.s32 0, %v909
    %v911 = vrot.slane %v906, %v910
    %v913 = vadd.f32 %v898, %v911
    %v914 = vadd.f32 %v903, %v911
    %vm915 = vcmp.gt.f32.partialorder %v913, 0.0
    %vm916 = vcmp.gt.f32.partialorder %v914, 0.0
    %v917 = vmin.f32 %v913, 0.0
    %v918 = vmin.f32 %v914, 0.0
    %v919 = vmul.f32 %v917, 1.442695
    %v920 = vpow.pop %v919
    %v921 = vmul.f32 %v918, 1.442695
    %v922 = vpow.pop %v921
    %v923 = vsub.f32 %v920, 1.0
    %v924 = vsub.f32 %v922, 1.0
    %v925 = vsel %vm915, %v913, %v923
    %v926 = vsel %vm916, %v914, %v924
    %929 = vrot.lane.b32.xlu0 %v913, 96
    %v930 = vpop.permute.xlu0 %929
    %931 = vrot.lane.b32.xlu0 %v914, 96
    %v932 = vpop.permute.xlu0 %931
    %vm935 = vcmask 31744
    %936 = vst.msk [vmem:[%s18] sm:$0xff] %vm935, %v930
    %937 = vst.msk [vmem:[%s18 + $0x8] sm:$0xff] %vm935, %v932
    %v938 = vld [vmem:[#allocation17] sm:$0xff]
    %v939 = vld [vmem:[#allocation17 + $0x8] sm:$0xff]
    %v940 = vld [vmem:[%s17] sm:$0x1]
    %v942 = vlaneseq
    %v943 = vshrl.u32 %v942, 7
    %v944 = vsub.s32 0, %v943
    %v945 = vrot.slane %v940, %v944
    %v948 = vsel %vm407, %v925, 0
    %v951 = vsel %vm407, %v926, 0
    %953 = vmatprep.subr.mxu0 0.0
    %954 = vmatpush1.msra.mxu0 %v938
    %955 = vmatprep.subr.mxu0 0.0
    %956 = vmatpush1.msra.mxu0 %v939
    %957 = vmatprep.subr.mxu0 0.0
    %958 = vmatpush1.msra.mxu0 0.0
    %959 = vmatprep.subr.mxu0 0.0
    %960 = vmatpush1.msra.mxu0 0.0
    %961 = vmatprep.subr.mxu0 0.0
    %962 = vmatpush1.msra.mxu0 0.0
    %963 = vmatprep.subr.mxu0 0.0
    %964 = vmatpush1.msra.mxu0 0.0
    %965 = vmatprep.subr.mxu0 0.0
    %966 = vmatpush1.msra.mxu0 0.0
    %967 = vmatprep.subr.mxu0 0.0
    %968 = vmatpush1.msra.mxu0 0.0
    %969 = vmatprep.subr.mxu0 0.0
    %970 = vmatpush1.msra.mxu0 0.0
    %971 = vmatprep.subr.mxu0 0.0
    %972 = vmatpush1.msra.mxu0 0.0
    %973 = vmatprep.subr.mxu0 0.0
    %974 = vmatpush1.msra.mxu0 0.0
    %975 = vmatprep.subr.mxu0 0.0
    %976 = vmatpush1.msra.mxu0 0.0
    %977 = vmatprep.subr.mxu0 0.0
    %978 = vmatpush1.msra.mxu0 0.0
    %979 = vmatprep.subr.mxu0 0.0
    %980 = vmatpush1.msra.mxu0 0.0
    %981 = vmatprep.subr.mxu0 0.0
    %982 = vmatpush1.msra.mxu0 0.0
    %983 = vmatprep.subr.mxu0 0.0
    %984 = vmatpush1.msra.mxu0 0.0
    %985 = vmatprep.subr.mxu0 0.0
    %986 = vmatpush1.msra.mxu0 0.0
    %987 = vmatprep.subr.mxu0 0.0
    %988 = vmatpush1.msra.mxu0 0.0
    %989 = vmatprep.subr.mxu0 0.0
    %990 = vmatpush1.msra.mxu0 0.0
    %991 = vmatprep.subr.mxu0 0.0
    %992 = vmatpush1.msra.mxu0 0.0
    %993 = vmatprep.subr.mxu0 0.0
    %994 = vmatpush1.msra.mxu0 0.0
    %995 = vmatprep.subr.mxu0 0.0
    %996 = vmatpush1.msra.mxu0 0.0
    %997 = vmatprep.subr.mxu0 0.0
    %998 = vmatpush1.msra.mxu0 0.0
    %999 = vmatprep.subr.mxu0 0.0
    %1000 = vmatpush1.msra.mxu0 0.0
    %1001 = vmatprep.subr.mxu0 0.0
    %1002 = vmatpush1.msra.mxu0 0.0
    %1003 = vmatprep.subr.mxu0 0.0
    %1004 = vmatpush1.msra.mxu0 0.0
    %1005 = vmatprep.subr.mxu0 0.0
    %1006 = vmatpush1.msra.mxu0 0.0
    %1007 = vmatprep.subr.mxu0 0.0
    %1008 = vmatpush1.msra.mxu0 0.0
    %1009 = vmatprep.subr.mxu0 0.0
    %1010 = vmatpush1.msra.mxu0 0.0
    %1011 = vmatprep.subr.mxu0 0.0
    %1012 = vmatpush1.msra.mxu0 0.0
    %1013 = vmatprep.subr.mxu0 0.0
    %1014 = vmatpush1.msra.mxu0 0.0
    %1015 = vmatprep.subr.mxu0 0.0
    %1016 = vmatpush1.msra.mxu0 0.0
    %1017 = vmatprep.mubr.f32.mxu0 0.0
    %1018 = vmatmul.mubr.f32.gmra.mrb[0].mxu0 %v948
    %v1019 = vpop.f32.mrb[0].mxu0
    %v1020 = vadd.f32 %v945, %v1019
    %v1021 = vpop.f32.mrb[0].mxu0
    %1022 = vmatprep.mubr.f32.mxu0 0.0
    %1023 = vmatmul.mubr.f32.gmra.mrb[0].mxu0 %v951
    %v1024 = vpop.f32.mrb[0].mxu0
    %v1025 = vadd.f32 %v945, %v1024
    %v1026 = vpop.f32.mrb[0].mxu0
    %1027 = vdwg.mxu0
    %v1028 = vsub.f32 %v1020, %v192
    %v1029 = vsub.f32 %v1025, %v193
    %v1030 = vmul.f32 %v1028, %v1028
    %v1031 = vmul.f32 %v1029, %v1029
    %v1032 = vsel %vm207, %v1030, 0.0
    %1033 = vadd.xlane.f32.xlu0 %v1032
    %v1034 = vpop.xlane.xlu0 %1033
    %v1035 = vsel %vm207, %v1031, 0.0
    %1036 = vadd.xlane.f32.xlu0 %v1035
    %v1037 = vpop.xlane.xlu0 %1036
    %v1038 = vadd.f32 %v1034, %v1037
    %v1039 = vrot.slane %v1038, 4
    %v1040 = vadd.f32 %v1038, %v1039
    %v1041 = vrot.slane %v1040, 2
    %v1042 = vadd.f32 %v1040, %v1041
    %v1043 = vrot.slane %v1042, 1
    %v1044 = vadd.f32 %v1042, %v1043
    %v1045 = vmul.f32 %v1044, 0.001953125
    %vm1046 = vcmask 0
    %1047 = vst.msk [vmem:[#allocation19] sm:$0x1] %vm1046, %v1045
    %1048 = vrot.lane.b32.xlu0 %v925, 112
    %v1049 = vpop.permute.xlu0 %1048
    %1050 = vrot.lane.b32.xlu0 %v926, 112
    %v1051 = vpop.permute.xlu0 %1050
    %v1052 = vsel %vm407, %v1049, 0
    %v1054 = vsel %vm407, %v1051, 0
    %1056 = vmatprep.subr.mxu0 0.0
    %1057 = vmatpush1.xpose.msra.mxu0 %v1052
    %1058 = vmatprep.subr.mxu0 0.0
    %1059 = vmatpush1.xpose.msra.mxu0 %v1054
    %1060 = vmatprep.subr.mxu0 0.0
    %1061 = vmatpush1.xpose.msra.mxu0 0.0
    %1062 = vmatprep.subr.mxu0 0.0
    %1063 = vmatpush1.xpose.msra.mxu0 0.0
    %1064 = vmatprep.subr.mxu0 0.0
    %1065 = vmatpush1.xpose.msra.mxu0 0.0
    %1066 = vmatprep.subr.mxu0 0.0
    %1067 = vmatpush1.xpose.msra.mxu0 0.0
    %1068 = vmatprep.subr.mxu0 0.0
    %1069 = vmatpush1.xpose.msra.mxu0 0.0
    %1070 = vmatprep.subr.mxu0 0.0
    %1071 = vmatpush1.xpose.msra.mxu0 0.0
    %1072 = vmatprep.subr.mxu0 0.0
    %1073 = vmatpush1.xpose.msra.mxu0 0.0
    %1074 = vmatprep.subr.mxu0 0.0
    %1075 = vmatpush1.xpose.msra.mxu0 0.0
    %1076 = vmatprep.subr.mxu0 0.0
    %1077 = vmatpush1.xpose.msra.mxu0 0.0
    %1078 = vmatprep.subr.mxu0 0.0
    %1079 = vmatpush1.xpose.msra.mxu0 0.0
    %1080 = vmatprep.subr.mxu0 0.0
    %1081 = vmatpush1.xpose.msra.mxu0 0.0
    %1082 = vmatprep.subr.mxu0 0.0
    %1083 = vmatpush1.xpose.msra.mxu0 0.0
    %1084 = vmatprep.subr.mxu0 0.0
    %1085 = vmatpush1.xpose.msra.mxu0 0.0
    %1086 = vmatprep.subr.mxu0 0.0
    %1087 = vmatpush1.xpose.msra.mxu0 0.0
    %1088 = vmatprep.subr.mxu0 0.0
    %1089 = vmatpush1.xpose.msra.mxu0 0.0
    %1090 = vmatprep.subr.mxu0 0.0
    %1091 = vmatpush1.xpose.msra.mxu0 0.0
    %1092 = vmatprep.subr.mxu0 0.0
    %1093 = vmatpush1.xpose.msra.mxu0 0.0
    %1094 = vmatprep.subr.mxu0 0.0
    %1095 = vmatpush1.xpose.msra.mxu0 0.0
    %1096 = vmatprep.subr.mxu0 0.0
    %1097 = vmatpush1.xpose.msra.mxu0 0.0
    %1098 = vmatprep.subr.mxu0 0.0
    %1099 = vmatpush1.xpose.msra.mxu0 0.0
    %1100 = vmatprep.subr.mxu0 0.0
    %1101 = vmatpush1.xpose.msra.mxu0 0.0
    %1102 = vmatprep.subr.mxu0 0.0
    %1103 = vmatpush1.xpose.msra.mxu0 0.0
    %1104 = vmatprep.subr.mxu0 0.0
    %1105 = vmatpush1.xpose.msra.mxu0 0.0
    %1106 = vmatprep.subr.mxu0 0.0
    %1107 = vmatpush1.xpose.msra.mxu0 0.0
    %1108 = vmatprep.subr.mxu0 0.0
    %1109 = vmatpush1.xpose.msra.mxu0 0.0
    %1110 = vmatprep.subr.mxu0 0.0
    %1111 = vmatpush1.xpose.msra.mxu0 0.0
    %1112 = vmatprep.subr.mxu0 0.0
    %1113 = vmatpush1.xpose.msra.mxu0 0.0
    %1114 = vmatprep.subr.mxu0 0.0
    %1115 = vmatpush1.xpose.msra.mxu0 0.0
    %1116 = vmatprep.subr.mxu0 0.0
    %1117 = vmatpush1.xpose.msra.mxu0 0.0
    %1118 = vmatprep.subr.mxu0 0.0
    %1119 = vmatpush1.xpose.msra.mxu0 0.0
    %1120 = vmatprep.mubr.f32.mxu0 0.0
    %1121 = vmatmul.mubr.f32.gmra.mrb[0].mxu0 %v1052
    %v1122 = vpop.f32.mrb[0].mxu0
    %v1123 = vadd.f32 0.0, %v1122
    %v1124 = vpop.f32.mrb[0].mxu0
    %1125 = vmatprep.mubr.f32.mxu0 0.0
    %1126 = vmatmul.mubr.f32.gmra.mrb[0].mxu0 %v1054
    %v1127 = vpop.f32.mrb[0].mxu0
    %v1128 = vadd.f32 0.0, %v1127
    %v1129 = vpop.f32.mrb[0].mxu0
    %1130 = vdwg.mxu0
    %v1131 = vmax.f32 %v1123, 0.0
    %v1132 = vmax.f32 %v1128, 0.0
    %v1133 = vand.u32 2147483647, %v1123
    %v1134 = vand.u32 2147483647, %v1128
    %v1135 = vsub.f32 0.0, %v1133
    %v1136 = vsub.f32 0.0, %v1134
    %v1137 = vmul.f32 %v1135, 1.442695
    %v1138 = vpow.pop %v1137
    %v1139 = vmul.f32 %v1136, 1.442695
    %v1140 = vpow.pop %v1139
    %v1141 = vadd.f32 %v1138, 1.0
    %v1142 = vlog2.pop %v1141
    %v1143 = vmul.f32 %v1142, 0.6931472
    %v1144 = vmul.f32 -0.5, %v1138
    %v1145 = vadd.f32 %v1144, 1.0
    %v1146 = vmul.f32 %v1145, %v1138
    %v1147 = vand.u32 2147483647, %v1138
    %vm1148 = vcmp.lt.f32.partialorder %v1147, 0.0004427343
    %v1149 = vsel %vm1148, %v1146, %v1143
    %v1150 = vadd.f32 %v1140, 1.0
    %v1151 = vlog2.pop %v1150
    %v1152 = vmul.f32 %v1151, 0.6931472
    %v1153 = vmul.f32 -0.5, %v1140
    %v1154 = vadd.f32 %v1153, 1.0
    %v1155 = vmul.f32 %v1154, %v1140
    %v1156 = vand.u32 2147483647, %v1140
    %vm1157 = vcmp.lt.f32.partialorder %v1156, 0.0004427343
    %v1158 = vsel %vm1157, %v1155, %v1152
    %v1159 = vadd.f32 %v1131, %v1149
    %v1160 = vadd.f32 %v1132, %v1158
    %v1161 = vsub.f32 %v1159, %v1123
    %v1162 = vsub.f32 %v1160, %v1128
    %v1163 = vld [vmem:[#allocation5] sm:$0xff]
    %v1164 = vld [vmem:[#allocation5 + $0x8] sm:$0xff]
    %v1165 = vld [vmem:[#allocation7] sm:$0xff]
    %v1166 = vld [vmem:[#allocation7 + $0x8] sm:$0xff]
    %v1167 = vmul.f32 %v1165, %v1161
    %v1168 = vmul.f32 %v1166, %v1162
    %v1169 = vsub.f32 %v1163, %v1165
    %v1170 = vsub.f32 %v1164, %v1166
    %v1171 = vmul.f32 %v1169, %v1159
    %v1172 = vmul.f32 %v1170, %v1160
    %v1173 = vadd.f32 %v1167, %v1171
    %v1174 = vadd.f32 %v1168, %v1172
    %v1175 = vld [vmem:[#allocation8] sm:$0xff]
    %v1176 = vld [vmem:[#allocation8 + $0x8] sm:$0xff]
    %v1177 = vmul.f32 %v1175, %v1159
    %v1178 = vmul.f32 %v1176, %v1160
    %v1179 = vmul.f32 %v744, 2.0
    %v1180 = vmul.f32 %v745, 2.0
    %v1181 = vadd.f32 %v1179, 1.0
    %v1182 = vadd.f32 %v1180, 1.0
    %v1183 = vmul.f32 %v736, %v736
    %v1184 = vmul.f32 %v741, %v741
    %1187 = vrot.lane.b32.xlu0 %v1183, 8
    %v1188 = vpop.permute.xlu0 %1187
    %1189 = vrot.lane.b32.xlu0 %v1184, 8
    %v1190 = vpop.permute.xlu0 %1189
    %v1193 = vsub.f32 %v1181, %v1188
    %v1194 = vsub.f32 %v1182, %v1190
    %v1195 = vmul.f32 %v1179, 1.442695
    %v1196 = vpow.pop %v1195
    %v1197 = vmul.f32 %v1180, 1.442695
    %v1198 = vpow.pop %v1197
    %v1199 = vsub.f32 %v1193, %v1196
    %v1200 = vsub.f32 %v1194, %v1198
    %v1201 = vsel %vm407, %v1173, 0.0
    %1202 = vadd.xlane.f32.xlu0 %v1201
    %v1203 = vpop.xlane.xlu0 %1202
    %v1204 = vsel %vm407, %v1174, 0.0
    %1205 = vadd.xlane.f32.xlu0 %v1204
    %v1206 = vpop.xlane.xlu0 %1205
    %v1207 = vadd.f32 %v1203, %v1206
    %v1208 = vrot.slane %v1207, 4
    %v1209 = vadd.f32 %v1207, %v1208
    %v1210 = vrot.slane %v1209, 2
    %v1211 = vadd.f32 %v1209, %v1210
    %v1212 = vrot.slane %v1211, 1
    %v1213 = vadd.f32 %v1211, %v1212
    %v1214 = vmul.f32 %v1213, 0.025
    %v1215 = vsel %vm407, %v1177, 0.0
    %1216 = vadd.xlane.f32.xlu0 %v1215
    %v1217 = vpop.xlane.xlu0 %1216
    %v1218 = vsel %vm407, %v1178, 0.0
    %1219 = vadd.xlane.f32.xlu0 %v1218
    %v1220 = vpop.xlane.xlu0 %1219
    %v1221 = vadd.f32 %v1217, %v1220
    %v1222 = vrot.slane %v1221, 4
    %v1223 = vadd.f32 %v1221, %v1222
    %v1224 = vrot.slane %v1223, 2
    %v1225 = vadd.f32 %v1223, %v1224
    %v1226 = vrot.slane %v1225, 1
    %v1227 = vadd.f32 %v1225, %v1226
    %v1228 = vmul.f32 %v1227, 0.017857144
    %v1229 = vadd.f32 %v1214, %v1228
    %1232 = vrot.lane.b32.xlu0 %v1199, 120
    %v1233 = vpop.permute.xlu0 %1232
    %1234 = vrot.lane.b32.xlu0 %v1200, 120
    %v1235 = vpop.permute.xlu0 %1234
    %v1238 = vsel %vm749, %v1233, 0.0
    %1239 = vadd.xlane.f32.xlu0 %v1238
    %v1240 = vpop.xlane.xlu0 %1239
    %v1241 = vsel %vm749, %v1235, 0.0
    %1242 = vadd.xlane.f32.xlu0 %v1241
    %v1243 = vpop.xlane.xlu0 %1242
    %v1244 = vadd.f32 %v1240, %v1243
    %v1245 = vrot.slane %v1244, 4
    %v1246 = vadd.f32 %v1244, %v1245
    %v1247 = vrot.slane %v1246, 2
    %v1248 = vadd.f32 %v1246, %v1247
    %v1249 = vrot.slane %v1248, 1
    %v1250 = vadd.f32 %v1248, %v1249
    %v1251 = vmul.f32 %v1250, 0.5
    %v1252 = vmul.f32 %v1251, 0.00390625
    %v1253 = vsub.f32 %v1229, %v1252
    %1254 = vst.msk [vmem:[#allocation20] sm:$0x1] %vm1046, %v1253
    // Predicated region
    $region114: #{tpu_custom_call.1} parent=1 // pred_check
      _
    $region115: #{tpu_custom_call.1} parent=1 // pred_check_branch
      %1256 = sbr.rel (0) target = $region117
    $region116: #{tpu_custom_call.1} parent=1 // pred_region
      _
    $region117: #{tpu_custom_call.1} parent=1 // pred_fallthru
      _
    // Predicated region
    $region118: #{tpu_custom_call.1} parent=1 // pred_check
      _
    $region119: #{tpu_custom_call.1} parent=1 // pred_check_branch
      %1258 = sbr.rel (0) target = $region121
    $region120: #{tpu_custom_call.1} parent=1 // pred_region
      %s1260 = ssub.s32 16, 16
      %1261 = vsyncadd [#allocation4], %s1260
      %s1263 = sshll.u32 [#allocation19], 4
      %s1264 = int_to_ptr.vmem [resolvable:$true] %s1263
      %1266 = dma.vmem_to_hbm [thread:$0]  %s1264, 16, %s19, [#allocation4]
    $region121: #{tpu_custom_call.1} parent=1 // pred_fallthru
      _
    // Predicated region
    $region122: #{tpu_custom_call.1} parent=1 // pred_check
      _
    $region123: #{tpu_custom_call.1} parent=1 // pred_check_branch
      %1268 = sbr.rel (0) target = $region125
    $region124: #{tpu_custom_call.1} parent=1 // pred_region
      %s1270 = ssub.s32 16, 16
      %1271 = vsyncadd [#allocation21], %s1270
      %s1273 = sshll.u32 [#allocation20], 4
      %s1274 = int_to_ptr.vmem [resolvable:$true] %s1273
      %1276 = dma.vmem_to_hbm [thread:$0]  %s1274, 16, %s20, [#allocation21]
    $region125: #{tpu_custom_call.1} parent=1 // pred_fallthru
      _
    // Predicated region
    $region126: #{tpu_custom_call.1} parent=1 // pred_check
      _
    $region127: #{tpu_custom_call.1} parent=1 // pred_check_branch
      %1278 = sbr.rel (0) target = $region129
    $region128: #{tpu_custom_call.1} parent=1 // pred_region
      _
    $region129: #{tpu_custom_call.1} parent=1 // pred_fallthru
      _
    // Predicated region
    $region130: #{tpu_custom_call.1} parent=1 // pred_check
      _
    $region131: #{tpu_custom_call.1} parent=1 // pred_check_branch
      %1280 = sbr.rel (0) target = $region133
    $region132: #{tpu_custom_call.1} parent=1 // pred_region
      %1281 = dma.done [#allocation4], 16
    $region133: #{tpu_custom_call.1} parent=1 // pred_fallthru
      _
    // Predicated region
    $region134: #{tpu_custom_call.1} parent=1 // pred_check
      _
    $region135: #{tpu_custom_call.1} parent=1 // pred_check_branch
      %1283 = sbr.rel (0) target = $region137
    $region136: #{tpu_custom_call.1} parent=1 // pred_region
      %1284 = dma.done [#allocation21], 16
    $region137: #{tpu_custom_call.1} parent=1 // pred_fallthru
      _
    %1285 = vsyncpa [#allocation3], 1
    %1286 = vsyncpa [#allocation6], 1
    %1287 = vsyncpa [#allocation9], 1
    %1288 = vsyncpa [#allocation12], 1
    %1289 = vsyncpa [#allocation15], 1
    %1290 = vsyncpa [#allocation18], 1
    %1291 = vsyncpa [#allocation4], 1
    %1292 = vsyncpa [#allocation21], 1

</llo_original>
